<compile_context>
chip_gen: v7x
topology: tpu7x:2x2x1
jax: 0.10.0
libtpu: 0.0.40
codegen_flags: <defaults>
</compile_context>

<pallas_src>
import jax
import jax.numpy as jnp
from jax.experimental import pallas as pl
from jax.experimental.pallas import tpu as pltpu

_LANE = 128
_OUT_ROWS = 8  # sublane-complete output tile; wrapper reads row 0


def _round_up(x, m):
    return (x + m - 1) // m * m


def critic_kernel(x_ref, w1_ref, w2_ref, w3_ref, o_ref):
    """One batch tile of the fused 3-layer critic MLP (batch on the lane axis).

    x_ref  : (F_pad, tb)  bf16   rows = [state | action | 0-pad | 1-carrier]
    w1_ref : (H1_pad, F_pad) bf16  bias folded into the carrier column
    w2_ref : (H2_pad, H1_pad) bf16 bias folded into the carrier column
    w3_ref : (8, H2_pad)   bf16   w3 replicated over 8 rows, b3 in carrier col
    o_ref  : (8, tb)       f32    q replicated over 8 sublanes, batch on lanes
    """
    # Layer 1: (H1, F) @ (F, tb) -> (tb,) worth of 512-wide hidden, bias via
    # the constant-1 carrier row of x (so relu(W1 x + b1) is a single matmul).
    h1 = jnp.dot(w1_ref[...], x_ref[...], preferred_element_type=jnp.float32)
    h1 = jnp.maximum(h1, 0.0).astype(jnp.bfloat16)        # carrier row stays 1.0

    # Layer 2: (H2, H1) @ (H1, tb); full 384x512 MXU tiles, f32 accumulate.
    h2 = jnp.dot(w2_ref[...], h1, preferred_element_type=jnp.float32)
    h2 = jnp.maximum(h2, 0.0).astype(jnp.bfloat16)        # carrier row stays 1.0

    # Layer 3 on the MXU: (8, H2) @ (H2, tb) -> (8, tb) output tile directly
    # (8 identical rows of q; b3 folded via the carrier row of h2).
    o_ref[...] = jnp.dot(w3_ref[...], h2, preferred_element_type=jnp.float32)


def critic_forward(state, action, packed_params, *, max_batch_tile=1024):
    """state: (B, state_dim) f32, action: (B, action_dim) f32 -> (B, 1) f32."""
    w1_aug, w2_aug, w3_rep = packed_params
    B, state_dim = state.shape
    action_dim = action.shape[1]
    h1_pad, f_pad = w1_aug.shape
    h2_pad = w2_aug.shape[0]
    n_feat = state_dim + action_dim

    # Batch tile: multiple of 128 (lane axis), capped so per-tile activations
    # stay a few MiB in VMEM, and chosen so the grid has >= 2 steps whenever
    # B > 128 (lets the "parallel" axis split across v7x's two TensorCores).
    tb = min(max_batch_tile, _round_up(pl.cdiv(B, 2), _LANE))
    b_pad = _round_up(B, tb)
    grid = (b_pad // tb,)

    # Single repack pass: [state | action | zero pad | 1-carrier], pad batch,
    # transpose to (F_pad, b_pad), cast to bf16.  Padded batch columns are all
    # zero (including the carrier), so they produce q = 0 and are sliced off.
    zpad = f_pad - n_feat - 1
    feat = jnp.concatenate(
        [state, action,
         jnp.zeros((B, zpad), jnp.float32),
         jnp.ones((B, 1), jnp.float32)],
        axis=1).astype(jnp.bfloat16)                       # (B, F_pad)
    x_t = jnp.pad(feat, ((0, b_pad - B), (0, 0))).T        # (F_pad, b_pad)

    def resident(arr):
        # Full-array block, constant index_map -> fetched once, stays in VMEM.
        return pl.BlockSpec(arr.shape, lambda i: (0, 0))

    out = pl.pallas_call(
        critic_kernel,
        out_shape=jax.ShapeDtypeStruct((_OUT_ROWS, b_pad), jnp.float32),
        grid=grid,
        in_specs=[
            pl.BlockSpec((f_pad, tb), lambda i: (0, i)),
            resident(w1_aug), resident(w2_aug), resident(w3_rep),
        ],
        out_specs=pl.BlockSpec((_OUT_ROWS, tb), lambda i: (0, i)),
        compiler_params=pltpu.CompilerParams(
            dimension_semantics=("parallel",),
            vmem_limit_bytes=32 * 1024 * 1024,
        ),
    )(x_t, w1_aug, w2_aug, w3_rep)

    return out[0, :B][:, None]


def init_critic_params(key, state_dim, action_dim, layer1_size=400, layer2_size=300):
    """Mirrors torch.nn.Linear default init: U(-1/sqrt(fan_in), +1/sqrt(fan_in)).

    Returns raw f32 params in PyTorch layout: (w1, b1, w2, b2, w3, b3) with
    weights shaped (out_features, in_features).
    """
    def linear(k, fan_in, fan_out):
        kw, kb = jax.random.split(k)
        bound = 1.0 / (float(fan_in) ** 0.5)
        w = jax.random.uniform(kw, (fan_out, fan_in), jnp.float32, -bound, bound)
        b = jax.random.uniform(kb, (fan_out,), jnp.float32, -bound, bound)
        return w, b

    k1, k2, k3 = jax.random.split(key, 3)
    w1, b1 = linear(k1, state_dim + action_dim, layer1_size)
    w2, b2 = linear(k2, layer1_size, layer2_size)
    w3, b3 = linear(k3, layer2_size, 1)
    return (w1, b1, w2, b2, w3, b3)


def pack_critic_params(raw_params, state_dim, action_dim):
    """Pad hidden dims to MXU/lane multiples and fold biases into bf16 weights.

    Layout (all exact thanks to zero padding + ReLU):
      w1_aug (H1p, Fp):  [:H1,:F]=w1, [:H1,Fp-1]=b1, [H1p-1,Fp-1]=1  (carrier)
      w2_aug (H2p, H1p): [:H2,:H1]=w2, [:H2,H1p-1]=b2, [H2p-1,H1p-1]=1
      w3_rep (8, H2p):   [:, :H2]=w3 (replicated rows), [:, H2p-1]=b3
    """
    w1, b1, w2, b2, w3, b3 = raw_params
    h1, n_feat = w1.shape
    h2 = w2.shape[0]

    f_pad = _round_up(n_feat + 1, 16)       # bf16 sublane pack
    h1_pad = _round_up(h1 + 1, _LANE)       # 400 -> 512
    h2_pad = _round_up(h2 + 1, _LANE)       # 300 -> 384

    w1_aug = jnp.zeros((h1_pad, f_pad), jnp.float32)
    w1_aug = w1_aug.at[:h1, :n_feat].set(w1)
    w1_aug = w1_aug.at[:h1, f_pad - 1].set(b1)
    w1_aug = w1_aug.at[h1_pad - 1, f_pad - 1].set(1.0)

    w2_aug = jnp.zeros((h2_pad, h1_pad), jnp.float32)
    w2_aug = w2_aug.at[:h2, :h1].set(w2)
    w2_aug = w2_aug.at[:h2, h1_pad - 1].set(b2)
    w2_aug = w2_aug.at[h2_pad - 1, h1_pad - 1].set(1.0)

    w3_rep = jnp.zeros((_OUT_ROWS, h2_pad), jnp.float32)
    w3_rep = w3_rep.at[:, :h2].set(jnp.broadcast_to(w3.reshape(1, h2), (_OUT_ROWS, h2)))
    w3_rep = w3_rep.at[:, h2_pad - 1].set(b3[0])

    return (w1_aug.astype(jnp.bfloat16),
            w2_aug.astype(jnp.bfloat16),
            w3_rep.astype(jnp.bfloat16))


if __name__ == "__main__":
    key = jax.random.PRNGKey(0)
    batch, state_dim, action_dim = 2, 8, 4

    k_params, k_state, k_action = jax.random.split(key, 3)
    raw = init_critic_params(k_params, state_dim, action_dim)
    packed = pack_critic_params(raw, state_dim, action_dim)

    state = jax.random.normal(k_state, (batch, state_dim), jnp.float32)
    action = jax.random.normal(k_action, (batch, action_dim), jnp.float32)

    q = critic_forward(state, action, packed)
    jax.block_until_ready(q)
    assert q.shape == (batch, 1)

    # Pure-JAX reference with the same bf16 quantization of the MXU operands.
    w1, b1, w2, b2, w3, b3 = raw

    def bq(a):
        return a.astype(jnp.bfloat16).astype(jnp.float32)

    x = jnp.concatenate([state, action], axis=1)
    h1 = jnp.maximum(bq(x) @ bq(w1).T + bq(b1), 0.0)
    h2 = jnp.maximum(bq(h1) @ bq(w2).T + bq(b2), 0.0)
    ref = bq(h2) @ bq(w3).T + bq(b3)

    assert jnp.allclose(q, ref, atol=1e-2, rtol=1e-2), (q, ref)
    print("KERNEL_OK")
</pallas_src>

<mosaic_0001>
module attributes {stable_mosaic.version = 11 : i64} {
  func.func @critic_kernel(%arg0: i32, %arg1: memref<16x128xbf16, #tpu.memory_space<vmem>>, %arg2: memref<512x16xbf16, #tpu.memory_space<vmem>>, %arg3: memref<384x512xbf16, #tpu.memory_space<vmem>>, %arg4: memref<8x384xbf16, #tpu.memory_space<vmem>>, %arg5: memref<8x128xf32, #tpu.memory_space<vmem>>) attributes {dimension_semantics = [#tpu.dimension_semantics<parallel>], iteration_bounds = array<i64: 1>, scalar_prefetch = 0 : i64, scratch_operands = 0 : i64, tpu.core_type = #tpu.core_type<tc>, window_params = [{transform_indices = @transform_0, window_bounds = array<i64: 16, 128>}, {pipeline_mode = #tpu.pipeline_mode<synchronous>, transform_indices = @transform_1, window_bounds = array<i64: 512, 16>}, {pipeline_mode = #tpu.pipeline_mode<synchronous>, transform_indices = @transform_2, window_bounds = array<i64: 384, 512>}, {pipeline_mode = #tpu.pipeline_mode<synchronous>, transform_indices = @transform_3, window_bounds = array<i64: 8, 384>}, {transform_indices = @transform_4, window_bounds = array<i64: 8, 128>}]} {
    %c0 = arith.constant 0 : index
    %c0_0 = arith.constant 0 : index
    %0 = vector.load %arg2[%c0, %c0_0] : memref<512x16xbf16, #tpu.memory_space<vmem>>, vector<512x16xbf16>
    %c0_1 = arith.constant 0 : index
    %c0_2 = arith.constant 0 : index
    %1 = vector.load %arg1[%c0_1, %c0_2] : memref<16x128xbf16, #tpu.memory_space<vmem>>, vector<16x128xbf16>
    %cst = arith.constant dense<0.000000e+00> : vector<512x128xf32>
    %2 = tpu.matmul %0, %1, %cst {dimension_numbers = #tpu.dot_dimension_numbers<[1], [0], [0], [1], [0, 0, 1, 1], [], []>} : vector<512x16xbf16>, vector<16x128xbf16>, vector<512x128xf32> -> vector<512x128xf32>
    %cst_3 = arith.constant 0.000000e+00 : f32
    %3 = vector.broadcast %cst_3 : f32 to vector<512x128xf32>
    %4 = arith.maximumf %2, %3 : vector<512x128xf32>
    %5 = arith.truncf %4 : vector<512x128xf32> to vector<512x128xbf16>
    %c0_4 = arith.constant 0 : index
    %c0_5 = arith.constant 0 : index
    %6 = vector.load %arg3[%c0_4, %c0_5] : memref<384x512xbf16, #tpu.memory_space<vmem>>, vector<384x512xbf16>
    %cst_6 = arith.constant dense<0.000000e+00> : vector<384x128xf32>
    %7 = tpu.matmul %6, %5, %cst_6 {dimension_numbers = #tpu.dot_dimension_numbers<[1], [0], [0], [1], [0, 0, 1, 1], [], []>} : vector<384x512xbf16>, vector<512x128xbf16>, vector<384x128xf32> -> vector<384x128xf32>
    %cst_7 = arith.constant 0.000000e+00 : f32
    %8 = vector.broadcast %cst_7 : f32 to vector<384x128xf32>
    %9 = arith.maximumf %7, %8 : vector<384x128xf32>
    %10 = arith.truncf %9 : vector<384x128xf32> to vector<384x128xbf16>
    %c0_8 = arith.constant 0 : index
    %c0_9 = arith.constant 0 : index
    %11 = vector.load %arg4[%c0_8, %c0_9] : memref<8x384xbf16, #tpu.memory_space<vmem>>, vector<8x384xbf16>
    %cst_10 = arith.constant dense<0.000000e+00> : vector<8x128xf32>
    %12 = tpu.matmul %11, %10, %cst_10 {dimension_numbers = #tpu.dot_dimension_numbers<[1], [0], [0], [1], [0, 0, 1, 1], [], []>} : vector<8x384xbf16>, vector<384x128xbf16>, vector<8x128xf32> -> vector<8x128xf32>
    %c0_11 = arith.constant 0 : index
    %c0_12 = arith.constant 0 : index
    %13 = vector.load %arg5[%c0_11, %c0_12] : memref<8x128xf32, #tpu.memory_space<vmem>>, vector<8x128xf32>
    tpu.vector_store %arg5[%c0_11, %c0_12], %12 {strides = array<i32>} : memref<8x128xf32, #tpu.memory_space<vmem>>, vector<8x128xf32>,
    return
  }
  func.func @transform_0(%arg0: i32) -> (i32, i32) {
    %c0_i32 = arith.constant 0 : i32
    %c0_i32_0 = arith.constant 0 : i32
    return %c0_i32, %arg0 : i32, i32
  }
  func.func @transform_1(%arg0: i32) -> (i32, i32) {
    %c0_i32 = arith.constant 0 : i32
    %c0_i32_0 = arith.constant 0 : i32
    %c0_i32_1 = arith.constant 0 : i32
    return %c0_i32, %c0_i32_0 : i32, i32
  }
  func.func @transform_2(%arg0: i32) -> (i32, i32) {
    %c0_i32 = arith.constant 0 : i32
    %c0_i32_0 = arith.constant 0 : i32
    %c0_i32_1 = arith.constant 0 : i32
    return %c0_i32, %c0_i32_0 : i32, i32
  }
  func.func @transform_3(%arg0: i32) -> (i32, i32) {
    %c0_i32 = arith.constant 0 : i32
    %c0_i32_0 = arith.constant 0 : i32
    %c0_i32_1 = arith.constant 0 : i32
    return %c0_i32, %c0_i32_0 : i32, i32
  }
  func.func @transform_4(%arg0: i32) -> (i32, i32) {
    %c0_i32 = arith.constant 0 : i32
    %c0_i32_0 = arith.constant 0 : i32
    return %c0_i32, %arg0 : i32, i32
  }
}

</mosaic_0001>

<llo_original>
// kernel: tpu_custom_call.1
$region0: #{tpu_custom_call.1}
  #allocation0 [shape = 'u32[]', space=smem, size = 0x4, offset = 0x4, fixed_abs, tag = 'smem constant byte address 0x4 - core index']
  #allocation1 [shape = 'u32[144,128]{1,0:T(1,128)}', space=vmem, size = 0x12000, scoped, tag = 'internal scratch']
  %s0 = inlined_call_operand.vmem [shape: bf16[16,128], index: 0, kind: input, shape index: {}]
  %s1 = inlined_call_operand.vmem [shape: bf16[512,16], index: 1, kind: input, shape index: {}]
  %s2 = inlined_call_operand.hbm [shape: bf16[384,512], index: 2, kind: input, shape index: {}]
  %s3 = inlined_call_operand.vmem [shape: bf16[8,384], index: 3, kind: input, shape index: {}]
  %s4 = inlined_call_operand.hbm [shape: f32[8,128], index: 4, kind: output, shape index: {}]
  %s5 = sld [smem:[#allocation0]]
  $region30: #{tpu_custom_call.1} parent=0
    _
  %s7 = ssub.s32 1, %s5
  %s8 = scalar_select 0, %s7, %s5
  $region1: #{tpu_custom_call.1} parent=0
    #allocation2 [shape = 'u8[393216]{0}', space=vmem, size = 0x60000, scoped, tag = 'input window, operand 2, single buffered']
    #allocation3 [shape = 's32[1]{0}', space=sflag, size = 0x4, scoped, tag = 'scoped memory for tpu_custom_call.1']
    #allocation4 [shape = 's32[1]{0}', space=sflag, size = 0x4, scoped, tag = 'scoped memory for tpu_custom_call.1']
    #allocation5 [shape = 'u8[4096]{0}', space=vmem, size = 0x1000, scoped, tag = 'output window, operand 0, single buffered']
    %9 = vsyncpa [#allocation3], 0
    %10 = vsyncpa [#allocation4], 0
    // Predicated region
    $region2: #{tpu_custom_call.1} parent=1 // pred_check
      _
    $region3: #{tpu_custom_call.1} parent=1 // pred_check_branch
      %12 = sbr.rel (0) target = $region5
    $region4: #{tpu_custom_call.1} parent=1 // pred_region
      _
    $region5: #{tpu_custom_call.1} parent=1 // pred_fallthru
      _
    // Predicated region
    $region6: #{tpu_custom_call.1} parent=1 // pred_check
      _
    $region7: #{tpu_custom_call.1} parent=1 // pred_check_branch
      %14 = sbr.rel (0) target = $region9
    $region8: #{tpu_custom_call.1} parent=1 // pred_region
      _
    $region9: #{tpu_custom_call.1} parent=1 // pred_fallthru
      _
    // Predicated region
    $region10: #{tpu_custom_call.1} parent=1 // pred_check
      _
    $region11: #{tpu_custom_call.1} parent=1 // pred_check_branch
      %16 = sbr.rel (0) target = $region13
    $region12: #{tpu_custom_call.1} parent=1 // pred_region
      %s18 = ssub.s32 12288, 12288
      %19 = vsyncadd [#allocation3], %s18
      %s20 = sshll.u32 [#allocation2], 4
      %s21 = int_to_ptr.vmem [resolvable:$true] %s20
      %26 = dma.hbm_to_vmem [thread:$0]  %s2, 12288, %s21, [#allocation3], 256, 256, 16
    $region13: #{tpu_custom_call.1} parent=1 // pred_fallthru
      _
    // Predicated region
    $region14: #{tpu_custom_call.1} parent=1 // pred_check
      _
    $region15: #{tpu_custom_call.1} parent=1 // pred_check_branch
      %28 = sbr.rel (0) target = $region17
    $region16: #{tpu_custom_call.1} parent=1 // pred_region
      _
    $region17: #{tpu_custom_call.1} parent=1 // pred_fallthru
      _
    // Predicated region
    $region18: #{tpu_custom_call.1} parent=1 // pred_check
      _
    $region19: #{tpu_custom_call.1} parent=1 // pred_check_branch
      %30 = sbr.rel (0) target = $region21
    $region20: #{tpu_custom_call.1} parent=1 // pred_region
      %31 = dma.done [#allocation3], 12288
    $region21: #{tpu_custom_call.1} parent=1 // pred_fallthru
      _
    %v33 = vld [vmem:[%s1] sm:$0xf]
    %v34 = vld [vmem:[%s1 + $0x4] sm:$0xf]
    %v35 = vld [vmem:[%s1 + $0x8] sm:$0xf]
    %v36 = vld [vmem:[%s1 + $0xc] sm:$0xf]
    %v37 = vld [vmem:[%s1 + $0x10] sm:$0xf]
    %v38 = vld [vmem:[%s1 + $0x14] sm:$0xf]
    %v39 = vld [vmem:[%s1 + $0x18] sm:$0xf]
    %v40 = vld [vmem:[%s1 + $0x1c] sm:$0xf]
    %v41 = vld [vmem:[%s1 + $0x20] sm:$0xf]
    %v42 = vld [vmem:[%s1 + $0x24] sm:$0xf]
    %v43 = vld [vmem:[%s1 + $0x28] sm:$0xf]
    %v44 = vld [vmem:[%s1 + $0x2c] sm:$0xf]
    %v45 = vld [vmem:[%s1 + $0x30] sm:$0xf]
    %v46 = vld [vmem:[%s1 + $0x34] sm:$0xf]
    %v47 = vld [vmem:[%s1 + $0x38] sm:$0xf]
    %v48 = vld [vmem:[%s1 + $0x3c] sm:$0xf]
    %v49 = vld [vmem:[%s1 + $0x40] sm:$0xf]
    %v50 = vld [vmem:[%s1 + $0x44] sm:$0xf]
    %v51 = vld [vmem:[%s1 + $0x48] sm:$0xf]
    %v52 = vld [vmem:[%s1 + $0x4c] sm:$0xf]
    %v53 = vld [vmem:[%s1 + $0x50] sm:$0xf]
    %v54 = vld [vmem:[%s1 + $0x54] sm:$0xf]
    %v55 = vld [vmem:[%s1 + $0x58] sm:$0xf]
    %v56 = vld [vmem:[%s1 + $0x5c] sm:$0xf]
    %v57 = vld [vmem:[%s1 + $0x60] sm:$0xf]
    %v58 = vld [vmem:[%s1 + $0x64] sm:$0xf]
    %v59 = vld [vmem:[%s1 + $0x68] sm:$0xf]
    %v60 = vld [vmem:[%s1 + $0x6c] sm:$0xf]
    %v61 = vld [vmem:[%s1 + $0x70] sm:$0xf]
    %v62 = vld [vmem:[%s1 + $0x74] sm:$0xf]
    %v63 = vld [vmem:[%s1 + $0x78] sm:$0xf]
    %v64 = vld [vmem:[%s1 + $0x7c] sm:$0xf]
    %v65 = vld [vmem:[%s1 + $0x80] sm:$0xf]
    %v66 = vld [vmem:[%s1 + $0x84] sm:$0xf]
    %v67 = vld [vmem:[%s1 + $0x88] sm:$0xf]
    %v68 = vld [vmem:[%s1 + $0x8c] sm:$0xf]
    %v69 = vld [vmem:[%s1 + $0x90] sm:$0xf]
    %v70 = vld [vmem:[%s1 + $0x94] sm:$0xf]
    %v71 = vld [vmem:[%s1 + $0x98] sm:$0xf]
    %v72 = vld [vmem:[%s1 + $0x9c] sm:$0xf]
    %v73 = vld [vmem:[%s1 + $0xa0] sm:$0xf]
    %v74 = vld [vmem:[%s1 + $0xa4] sm:$0xf]
    %v75 = vld [vmem:[%s1 + $0xa8] sm:$0xf]
    %v76 = vld [vmem:[%s1 + $0xac] sm:$0xf]
    %v77 = vld [vmem:[%s1 + $0xb0] sm:$0xf]
    %v78 = vld [vmem:[%s1 + $0xb4] sm:$0xf]
    %v79 = vld [vmem:[%s1 + $0xb8] sm:$0xf]
    %v80 = vld [vmem:[%s1 + $0xbc] sm:$0xf]
    %v81 = vld [vmem:[%s1 + $0xc0] sm:$0xf]
    %v82 = vld [vmem:[%s1 + $0xc4] sm:$0xf]
    %v83 = vld [vmem:[%s1 + $0xc8] sm:$0xf]
    %v84 = vld [vmem:[%s1 + $0xcc] sm:$0xf]
    %v85 = vld [vmem:[%s1 + $0xd0] sm:$0xf]
    %v86 = vld [vmem:[%s1 + $0xd4] sm:$0xf]
    %v87 = vld [vmem:[%s1 + $0xd8] sm:$0xf]
    %v88 = vld [vmem:[%s1 + $0xdc] sm:$0xf]
    %v89 = vld [vmem:[%s1 + $0xe0] sm:$0xf]
    %v90 = vld [vmem:[%s1 + $0xe4] sm:$0xf]
    %v91 = vld [vmem:[%s1 + $0xe8] sm:$0xf]
    %v92 = vld [vmem:[%s1 + $0xec] sm:$0xf]
    %v93 = vld [vmem:[%s1 + $0xf0] sm:$0xf]
    %v94 = vld [vmem:[%s1 + $0xf4] sm:$0xf]
    %v95 = vld [vmem:[%s1 + $0xf8] sm:$0xf]
    %v96 = vld [vmem:[%s1 + $0xfc] sm:$0xf]
    %v97 = vld [vmem:[%s0] sm:$0xf]
    %v98 = vld [vmem:[%s0 + $0x4] sm:$0xf]
    %v163 = vunpack.c.l.b16 %v33
    %v164 = vunpack.c.l.b16 %v34
    %v165 = vunpack.c.l.b16 %v35
    %v166 = vunpack.c.l.b16 %v36
    %v167 = vunpack.c.l.b16 %v37
    %v168 = vunpack.c.l.b16 %v38
    %v169 = vunpack.c.l.b16 %v39
    %v170 = vunpack.c.l.b16 %v40
    %v171 = vunpack.c.l.b16 %v41
    %v172 = vunpack.c.l.b16 %v42
    %v173 = vunpack.c.l.b16 %v43
    %v174 = vunpack.c.l.b16 %v44
    %v175 = vunpack.c.l.b16 %v45
    %v176 = vunpack.c.l.b16 %v46
    %v177 = vunpack.c.l.b16 %v47
    %v178 = vunpack.c.l.b16 %v48
    %v179 = vunpack.c.l.b16 %v49
    %v180 = vunpack.c.l.b16 %v50
    %v181 = vunpack.c.l.b16 %v51
    %v182 = vunpack.c.l.b16 %v52
    %v183 = vunpack.c.l.b16 %v53
    %v184 = vunpack.c.l.b16 %v54
    %v185 = vunpack.c.l.b16 %v55
    %v186 = vunpack.c.l.b16 %v56
    %v187 = vunpack.c.l.b16 %v57
    %v188 = vunpack.c.l.b16 %v58
    %v189 = vunpack.c.l.b16 %v59
    %v190 = vunpack.c.l.b16 %v60
    %v191 = vunpack.c.l.b16 %v61
    %v192 = vunpack.c.l.b16 %v62
    %v193 = vunpack.c.l.b16 %v63
    %v194 = vunpack.c.l.b16 %v64
    %v195 = vunpack.c.l.b16 %v65
    %v196 = vunpack.c.l.b16 %v66
    %v197 = vunpack.c.l.b16 %v67
    %v198 = vunpack.c.l.b16 %v68
    %v199 = vunpack.c.l.b16 %v69
    %v200 = vunpack.c.l.b16 %v70
    %v201 = vunpack.c.l.b16 %v71
    %v202 = vunpack.c.l.b16 %v72
    %v203 = vunpack.c.l.b16 %v73
    %v204 = vunpack.c.l.b16 %v74
    %v205 = vunpack.c.l.b16 %v75
    %v206 = vunpack.c.l.b16 %v76
    %v207 = vunpack.c.l.b16 %v77
    %v208 = vunpack.c.l.b16 %v78
    %v209 = vunpack.c.l.b16 %v79
    %v210 = vunpack.c.l.b16 %v80
    %v211 = vunpack.c.l.b16 %v81
    %v212 = vunpack.c.l.b16 %v82
    %v213 = vunpack.c.l.b16 %v83
    %v214 = vunpack.c.l.b16 %v84
    %v215 = vunpack.c.l.b16 %v85
    %v216 = vunpack.c.l.b16 %v86
    %v217 = vunpack.c.l.b16 %v87
    %v218 = vunpack.c.l.b16 %v88
    %v219 = vunpack.c.l.b16 %v89
    %v220 = vunpack.c.l.b16 %v90
    %v221 = vunpack.c.l.b16 %v91
    %v222 = vunpack.c.l.b16 %v92
    %v223 = vunpack.c.l.b16 %v93
    %v224 = vunpack.c.l.b16 %v94
    %v225 = vunpack.c.l.b16 %v95
    %v226 = vunpack.c.l.b16 %v96
    %v227 = vpack.c.b16 %v164, %v163
    %v228 = vpack.c.b16 %v166, %v165
    %v229 = vpack.c.b16 %v168, %v167
    %v230 = vpack.c.b16 %v170, %v169
    %v231 = vpack.c.b16 %v172, %v171
    %v232 = vpack.c.b16 %v174, %v173
    %v233 = vpack.c.b16 %v176, %v175
    %v234 = vpack.c.b16 %v178, %v177
    %v235 = vpack.c.b16 %v180, %v179
    %v236 = vpack.c.b16 %v182, %v181
    %v237 = vpack.c.b16 %v184, %v183
    %v238 = vpack.c.b16 %v186, %v185
    %v239 = vpack.c.b16 %v188, %v187
    %v240 = vpack.c.b16 %v190, %v189
    %v241 = vpack.c.b16 %v192, %v191
    %v242 = vpack.c.b16 %v194, %v193
    %v243 = vpack.c.b16 %v196, %v195
    %v244 = vpack.c.b16 %v198, %v197
    %v245 = vpack.c.b16 %v200, %v199
    %v246 = vpack.c.b16 %v202, %v201
    %v247 = vpack.c.b16 %v204, %v203
    %v248 = vpack.c.b16 %v206, %v205
    %v249 = vpack.c.b16 %v208, %v207
    %v250 = vpack.c.b16 %v210, %v209
    %v251 = vpack.c.b16 %v212, %v211
    %v252 = vpack.c.b16 %v214, %v213
    %v253 = vpack.c.b16 %v216, %v215
    %v254 = vpack.c.b16 %v218, %v217
    %v255 = vpack.c.b16 %v220, %v219
    %v256 = vpack.c.b16 %v222, %v221
    %v257 = vpack.c.b16 %v224, %v223
    %v258 = vpack.c.b16 %v226, %v225
    %v261 = vunpack.c.l.b16 %v97
    %v262 = vunpack.c.l.b16 %v98
    %v263 = vpack.c.b16 %v262, %v261
    %vm265 = vcmask 130048
    %v267 = vsel %vm265, %v227, 0
    %v270 = vsel %vm265, %v228, 0
    %v273 = vsel %vm265, %v229, 0
    %v276 = vsel %vm265, %v230, 0
    %v279 = vsel %vm265, %v231, 0
    %v282 = vsel %vm265, %v232, 0
    %v285 = vsel %vm265, %v233, 0
    %v288 = vsel %vm265, %v234, 0
    %v291 = vsel %vm265, %v235, 0
    %v294 = vsel %vm265, %v236, 0
    %v297 = vsel %vm265, %v237, 0
    %v300 = vsel %vm265, %v238, 0
    %v303 = vsel %vm265, %v239, 0
    %v306 = vsel %vm265, %v240, 0
    %v309 = vsel %vm265, %v241, 0
    %v312 = vsel %vm265, %v242, 0
    %v315 = vsel %vm265, %v243, 0
    %v318 = vsel %vm265, %v244, 0
    %v321 = vsel %vm265, %v245, 0
    %v324 = vsel %vm265, %v246, 0
    %v327 = vsel %vm265, %v247, 0
    %v330 = vsel %vm265, %v248, 0
    %v333 = vsel %vm265, %v249, 0
    %v336 = vsel %vm265, %v250, 0
    %v339 = vsel %vm265, %v251, 0
    %v342 = vsel %vm265, %v252, 0
    %v345 = vsel %vm265, %v253, 0
    %v348 = vsel %vm265, %v254, 0
    %v351 = vsel %vm265, %v255, 0
    %v354 = vsel %vm265, %v256, 0
    %v357 = vsel %vm265, %v257, 0
    %v360 = vsel %vm265, %v258, 0
    %362 = vmatprep.subr.bf16.mxu0 0
    %363 = vmatpush1.bf16.msra.mxu0 %v263
    %364 = vmatprep.subr.bf16.mxu0 0
    %365 = vmatpush1.bf16.msra.mxu0 0
    %366 = vmatprep.subr.bf16.mxu0 0
    %367 = vmatpush1.bf16.msra.mxu0 0
    %368 = vmatprep.subr.bf16.mxu0 0
    %369 = vmatpush1.bf16.msra.mxu0 0
    %370 = vmatprep.subr.bf16.mxu0 0
    %371 = vmatpush1.bf16.msra.mxu0 0
    %372 = vmatprep.subr.bf16.mxu0 0
    %373 = vmatpush1.bf16.msra.mxu0 0
    %374 = vmatprep.subr.bf16.mxu0 0
    %375 = vmatpush1.bf16.msra.mxu0 0
    %376 = vmatprep.subr.bf16.mxu0 0
    %377 = vmatpush1.bf16.msra.mxu0 0
    %378 = vmatprep.subr.bf16.mxu0 0
    %379 = vmatpush1.bf16.msra.mxu0 0
    %380 = vmatprep.subr.bf16.mxu0 0
    %381 = vmatpush1.bf16.msra.mxu0 0
    %382 = vmatprep.subr.bf16.mxu0 0
    %383 = vmatpush1.bf16.msra.mxu0 0
    %384 = vmatprep.subr.bf16.mxu0 0
    %385 = vmatpush1.bf16.msra.mxu0 0
    %386 = vmatprep.subr.bf16.mxu0 0
    %387 = vmatpush1.bf16.msra.mxu0 0
    %388 = vmatprep.subr.bf16.mxu0 0
    %389 = vmatpush1.bf16.msra.mxu0 0
    %390 = vmatprep.subr.bf16.mxu0 0
    %391 = vmatpush1.bf16.msra.mxu0 0
    %392 = vmatprep.subr.bf16.mxu0 0
    %393 = vmatpush1.bf16.msra.mxu0 0
    %394 = vmatprep.mubr.bf16.mxu0 0
    %395 = vmatmul.mubr.bf16.gmra.mrb[0].mxu0 %v267
    %v396 = vpop.f32.mrb[0].mxu0
    %v397 = vadd.f32 0.0, %v396
    %v398 = vpop.f32.mrb[0].mxu0
    %v399 = vpop.f32.mrb[0].mxu0
    %v400 = vadd.f32 0.0, %v399
    %v401 = vpop.f32.mrb[0].mxu0
    %402 = vmatprep.mubr.bf16.mxu0 0
    %403 = vmatmul.mubr.bf16.gmra.mrb[0].mxu0 %v270
    %v404 = vpop.f32.mrb[0].mxu0
    %v405 = vadd.f32 0.0, %v404
    %v406 = vpop.f32.mrb[0].mxu0
    %v407 = vpop.f32.mrb[0].mxu0
    %v408 = vadd.f32 0.0, %v407
    %v409 = vpop.f32.mrb[0].mxu0
    %410 = vmatprep.mubr.bf16.mxu0 0
    %411 = vmatmul.mubr.bf16.gmra.mrb[0].mxu0 %v273
    %v412 = vpop.f32.mrb[0].mxu0
    %v413 = vadd.f32 0.0, %v412
    %v414 = vpop.f32.mrb[0].mxu0
    %v415 = vpop.f32.mrb[0].mxu0
    %v416 = vadd.f32 0.0, %v415
    %v417 = vpop.f32.mrb[0].mxu0
    %418 = vmatprep.mubr.bf16.mxu0 0
    %419 = vmatmul.mubr.bf16.gmra.mrb[0].mxu0 %v276
    %v420 = vpop.f32.mrb[0].mxu0
    %v421 = vadd.f32 0.0, %v420
    %v422 = vpop.f32.mrb[0].mxu0
    %v423 = vpop.f32.mrb[0].mxu0
    %v424 = vadd.f32 0.0, %v423
    %v425 = vpop.f32.mrb[0].mxu0
    %426 = vmatprep.mubr.bf16.mxu0 0
    %427 = vmatmul.mubr.bf16.gmra.mrb[0].mxu0 %v279
    %v428 = vpop.f32.mrb[0].mxu0
    %v429 = vadd.f32 0.0, %v428
    %v430 = vpop.f32.mrb[0].mxu0
    %v431 = vpop.f32.mrb[0].mxu0
    %v432 = vadd.f32 0.0, %v431
    %v433 = vpop.f32.mrb[0].mxu0
    %434 = vmatprep.mubr.bf16.mxu0 0
    %435 = vmatmul.mubr.bf16.gmra.mrb[0].mxu0 %v282
    %v436 = vpop.f32.mrb[0].mxu0
    %v437 = vadd.f32 0.0, %v436
    %v438 = vpop.f32.mrb[0].mxu0
    %v439 = vpop.f32.mrb[0].mxu0
    %v440 = vadd.f32 0.0, %v439
    %v441 = vpop.f32.mrb[0].mxu0
    %442 = vmatprep.mubr.bf16.mxu0 0
    %443 = vmatmul.mubr.bf16.gmra.mrb[0].mxu0 %v285
    %v444 = vpop.f32.mrb[0].mxu0
    %v445 = vadd.f32 0.0, %v444
    %v446 = vpop.f32.mrb[0].mxu0
    %v447 = vpop.f32.mrb[0].mxu0
    %v448 = vadd.f32 0.0, %v447
    %v449 = vpop.f32.mrb[0].mxu0
    %450 = vmatprep.mubr.bf16.mxu0 0
    %451 = vmatmul.mubr.bf16.gmra.mrb[0].mxu0 %v288
    %v452 = vpop.f32.mrb[0].mxu0
    %v453 = vadd.f32 0.0, %v452
    %v454 = vpop.f32.mrb[0].mxu0
    %v455 = vpop.f32.mrb[0].mxu0
    %v456 = vadd.f32 0.0, %v455
    %v457 = vpop.f32.mrb[0].mxu0
    %458 = vmatprep.mubr.bf16.mxu0 0
    %459 = vmatmul.mubr.bf16.gmra.mrb[0].mxu0 %v291
    %v460 = vpop.f32.mrb[0].mxu0
    %v461 = vadd.f32 0.0, %v460
    %v462 = vpop.f32.mrb[0].mxu0
    %v463 = vpop.f32.mrb[0].mxu0
    %v464 = vadd.f32 0.0, %v463
    %v465 = vpop.f32.mrb[0].mxu0
    %466 = vmatprep.mubr.bf16.mxu0 0
    %467 = vmatmul.mubr.bf16.gmra.mrb[0].mxu0 %v294
    %v468 = vpop.f32.mrb[0].mxu0
    %v469 = vadd.f32 0.0, %v468
    %v470 = vpop.f32.mrb[0].mxu0
    %v471 = vpop.f32.mrb[0].mxu0
    %v472 = vadd.f32 0.0, %v471
    %v473 = vpop.f32.mrb[0].mxu0
    %474 = vmatprep.mubr.bf16.mxu0 0
    %475 = vmatmul.mubr.bf16.gmra.mrb[0].mxu0 %v297
    %v476 = vpop.f32.mrb[0].mxu0
    %v477 = vadd.f32 0.0, %v476
    %v478 = vpop.f32.mrb[0].mxu0
    %v479 = vpop.f32.mrb[0].mxu0
    %v480 = vadd.f32 0.0, %v479
    %v481 = vpop.f32.mrb[0].mxu0
    %482 = vmatprep.mubr.bf16.mxu0 0
    %483 = vmatmul.mubr.bf16.gmra.mrb[0].mxu0 %v300
    %v484 = vpop.f32.mrb[0].mxu0
    %v485 = vadd.f32 0.0, %v484
    %v486 = vpop.f32.mrb[0].mxu0
    %v487 = vpop.f32.mrb[0].mxu0
    %v488 = vadd.f32 0.0, %v487
    %v489 = vpop.f32.mrb[0].mxu0
    %490 = vmatprep.mubr.bf16.mxu0 0
    %491 = vmatmul.mubr.bf16.gmra.mrb[0].mxu0 %v303
    %v492 = vpop.f32.mrb[0].mxu0
    %v493 = vadd.f32 0.0, %v492
    %v494 = vpop.f32.mrb[0].mxu0
    %v495 = vpop.f32.mrb[0].mxu0
    %v496 = vadd.f32 0.0, %v495
    %v497 = vpop.f32.mrb[0].mxu0
    %498 = vmatprep.mubr.bf16.mxu0 0
    %499 = vmatmul.mubr.bf16.gmra.mrb[0].mxu0 %v306
    %v500 = vpop.f32.mrb[0].mxu0
    %v501 = vadd.f32 0.0, %v500
    %v502 = vpop.f32.mrb[0].mxu0
    %v503 = vpop.f32.mrb[0].mxu0
    %v504 = vadd.f32 0.0, %v503
    %v505 = vpop.f32.mrb[0].mxu0
    %506 = vmatprep.mubr.bf16.mxu0 0
    %507 = vmatmul.mubr.bf16.gmra.mrb[0].mxu0 %v309
    %v508 = vpop.f32.mrb[0].mxu0
    %v509 = vadd.f32 0.0, %v508
    %v510 = vpop.f32.mrb[0].mxu0
    %v511 = vpop.f32.mrb[0].mxu0
    %v512 = vadd.f32 0.0, %v511
    %v513 = vpop.f32.mrb[0].mxu0
    %514 = vmatprep.mubr.bf16.mxu0 0
    %515 = vmatmul.mubr.bf16.gmra.mrb[0].mxu0 %v312
    %v516 = vpop.f32.mrb[0].mxu0
    %v517 = vadd.f32 0.0, %v516
    %v518 = vpop.f32.mrb[0].mxu0
    %v519 = vpop.f32.mrb[0].mxu0
    %v520 = vadd.f32 0.0, %v519
    %v521 = vpop.f32.mrb[0].mxu0
    %522 = vmatprep.mubr.bf16.mxu0 0
    %523 = vmatmul.mubr.bf16.gmra.mrb[0].mxu0 %v315
    %v524 = vpop.f32.mrb[0].mxu0
    %v525 = vadd.f32 0.0, %v524
    %v526 = vpop.f32.mrb[0].mxu0
    %v527 = vpop.f32.mrb[0].mxu0
    %v528 = vadd.f32 0.0, %v527
    %v529 = vpop.f32.mrb[0].mxu0
    %530 = vmatprep.mubr.bf16.mxu0 0
    %531 = vmatmul.mubr.bf16.gmra.mrb[0].mxu0 %v318
    %v532 = vpop.f32.mrb[0].mxu0
    %v533 = vadd.f32 0.0, %v532
    %v534 = vpop.f32.mrb[0].mxu0
    %v535 = vpop.f32.mrb[0].mxu0
    %v536 = vadd.f32 0.0, %v535
    %v537 = vpop.f32.mrb[0].mxu0
    %538 = vmatprep.mubr.bf16.mxu0 0
    %539 = vmatmul.mubr.bf16.gmra.mrb[0].mxu0 %v321
    %v540 = vpop.f32.mrb[0].mxu0
    %v541 = vadd.f32 0.0, %v540
    %v542 = vpop.f32.mrb[0].mxu0
    %v543 = vpop.f32.mrb[0].mxu0
    %v544 = vadd.f32 0.0, %v543
    %v545 = vpop.f32.mrb[0].mxu0
    %546 = vmatprep.mubr.bf16.mxu0 0
    %547 = vmatmul.mubr.bf16.gmra.mrb[0].mxu0 %v324
    %v548 = vpop.f32.mrb[0].mxu0
    %v549 = vadd.f32 0.0, %v548
    %v550 = vpop.f32.mrb[0].mxu0
    %v551 = vpop.f32.mrb[0].mxu0
    %v552 = vadd.f32 0.0, %v551
    %v553 = vpop.f32.mrb[0].mxu0
    %554 = vmatprep.mubr.bf16.mxu0 0
    %555 = vmatmul.mubr.bf16.gmra.mrb[0].mxu0 %v327
    %v556 = vpop.f32.mrb[0].mxu0
    %v557 = vadd.f32 0.0, %v556
    %v558 = vpop.f32.mrb[0].mxu0
    %v559 = vpop.f32.mrb[0].mxu0
    %v560 = vadd.f32 0.0, %v559
    %v561 = vpop.f32.mrb[0].mxu0
    %562 = vmatprep.mubr.bf16.mxu0 0
    %563 = vmatmul.mubr.bf16.gmra.mrb[0].mxu0 %v330
    %v564 = vpop.f32.mrb[0].mxu0
    %v565 = vadd.f32 0.0, %v564
    %v566 = vpop.f32.mrb[0].mxu0
    %v567 = vpop.f32.mrb[0].mxu0
    %v568 = vadd.f32 0.0, %v567
    %v569 = vpop.f32.mrb[0].mxu0
    %570 = vmatprep.mubr.bf16.mxu0 0
    %571 = vmatmul.mubr.bf16.gmra.mrb[0].mxu0 %v333
    %v572 = vpop.f32.mrb[0].mxu0
    %v573 = vadd.f32 0.0, %v572
    %v574 = vpop.f32.mrb[0].mxu0
    %v575 = vpop.f32.mrb[0].mxu0
    %v576 = vadd.f32 0.0, %v575
    %v577 = vpop.f32.mrb[0].mxu0
    %578 = vmatprep.mubr.bf16.mxu0 0
    %579 = vmatmul.mubr.bf16.gmra.mrb[0].mxu0 %v336
    %v580 = vpop.f32.mrb[0].mxu0
    %v581 = vadd.f32 0.0, %v580
    %v582 = vpop.f32.mrb[0].mxu0
    %v583 = vpop.f32.mrb[0].mxu0
    %v584 = vadd.f32 0.0, %v583
    %v585 = vpop.f32.mrb[0].mxu0
    %586 = vmatprep.mubr.bf16.mxu0 0
    %587 = vmatmul.mubr.bf16.gmra.mrb[0].mxu0 %v339
    %v588 = vpop.f32.mrb[0].mxu0
    %v589 = vadd.f32 0.0, %v588
    %v590 = vpop.f32.mrb[0].mxu0
    %v591 = vpop.f32.mrb[0].mxu0
    %v592 = vadd.f32 0.0, %v591
    %v593 = vpop.f32.mrb[0].mxu0
    %594 = vmatprep.mubr.bf16.mxu0 0
    %595 = vmatmul.mubr.bf16.gmra.mrb[0].mxu0 %v342
    %v596 = vpop.f32.mrb[0].mxu0
    %v597 = vadd.f32 0.0, %v596
    %v598 = vpop.f32.mrb[0].mxu0
    %v599 = vpop.f32.mrb[0].mxu0
    %v600 = vadd.f32 0.0, %v599
    %v601 = vpop.f32.mrb[0].mxu0
    %602 = vmatprep.mubr.bf16.mxu0 0
    %603 = vmatmul.mubr.bf16.gmra.mrb[0].mxu0 %v345
    %v604 = vpop.f32.mrb[0].mxu0
    %v605 = vadd.f32 0.0, %v604
    %v606 = vpop.f32.mrb[0].mxu0
    %v607 = vpop.f32.mrb[0].mxu0
    %v608 = vadd.f32 0.0, %v607
    %v609 = vpop.f32.mrb[0].mxu0
    %610 = vmatprep.mubr.bf16.mxu0 0
    %611 = vmatmul.mubr.bf16.gmra.mrb[0].mxu0 %v348
    %v612 = vpop.f32.mrb[0].mxu0
    %v613 = vadd.f32 0.0, %v612
    %v614 = vpop.f32.mrb[0].mxu0
    %v615 = vpop.f32.mrb[0].mxu0
    %v616 = vadd.f32 0.0, %v615
    %v617 = vpop.f32.mrb[0].mxu0
    %618 = vmatprep.mubr.bf16.mxu0 0
    %619 = vmatmul.mubr.bf16.gmra.mrb[0].mxu0 %v351
    %v620 = vpop.f32.mrb[0].mxu0
    %v621 = vadd.f32 0.0, %v620
    %v622 = vpop.f32.mrb[0].mxu0
    %v623 = vpop.f32.mrb[0].mxu0
    %v624 = vadd.f32 0.0, %v623
    %v625 = vpop.f32.mrb[0].mxu0
    %626 = vmatprep.mubr.bf16.mxu0 0
    %627 = vmatmul.mubr.bf16.gmra.mrb[0].mxu0 %v354
    %v628 = vpop.f32.mrb[0].mxu0
    %v629 = vadd.f32 0.0, %v628
    %v630 = vpop.f32.mrb[0].mxu0
    %v631 = vpop.f32.mrb[0].mxu0
    %v632 = vadd.f32 0.0, %v631
    %v633 = vpop.f32.mrb[0].mxu0
    %634 = vmatprep.mubr.bf16.mxu0 0
    %635 = vmatmul.mubr.bf16.gmra.mrb[0].mxu0 %v357
    %v636 = vpop.f32.mrb[0].mxu0
    %v637 = vadd.f32 0.0, %v636
    %v638 = vpop.f32.mrb[0].mxu0
    %v639 = vpop.f32.mrb[0].mxu0
    %v640 = vadd.f32 0.0, %v639
    %v641 = vpop.f32.mrb[0].mxu0
    %642 = vmatprep.mubr.bf16.mxu0 0
    %643 = vmatmul.mubr.bf16.gmra.mrb[0].mxu0 %v360
    %v644 = vpop.f32.mrb[0].mxu0
    %v645 = vadd.f32 0.0, %v644
    %v646 = vpop.f32.mrb[0].mxu0
    %v647 = vpop.f32.mrb[0].mxu0
    %v648 = vadd.f32 0.0, %v647
    %v649 = vpop.f32.mrb[0].mxu0
    %650 = vdwg.mxu0
    %v651 = vmax.f32 %v397, 0.0
    %v652 = vmax.f32 %v400, 0.0
    %v653 = vmax.f32 %v405, 0.0
    %v654 = vmax.f32 %v408, 0.0
    %v655 = vmax.f32 %v413, 0.0
    %v656 = vmax.f32 %v416, 0.0
    %v657 = vmax.f32 %v421, 0.0
    %v658 = vmax.f32 %v424, 0.0
    %v659 = vmax.f32 %v429, 0.0
    %v660 = vmax.f32 %v432, 0.0
    %v661 = vmax.f32 %v437, 0.0
    %v662 = vmax.f32 %v440, 0.0
    %v663 = vmax.f32 %v445, 0.0
    %v664 = vmax.f32 %v448, 0.0
    %v665 = vmax.f32 %v453, 0.0
    %v666 = vmax.f32 %v456, 0.0
    %v667 = vmax.f32 %v461, 0.0
    %v668 = vmax.f32 %v464, 0.0
    %v669 = vmax.f32 %v469, 0.0
    %v670 = vmax.f32 %v472, 0.0
    %v671 = vmax.f32 %v477, 0.0
    %v672 = vmax.f32 %v480, 0.0
    %v673 = vmax.f32 %v485, 0.0
    %v674 = vmax.f32 %v488, 0.0
    %v675 = vmax.f32 %v493, 0.0
    %v676 = vmax.f32 %v496, 0.0
    %v677 = vmax.f32 %v501, 0.0
    %v678 = vmax.f32 %v504, 0.0
    %v679 = vmax.f32 %v509, 0.0
    %v680 = vmax.f32 %v512, 0.0
    %v681 = vmax.f32 %v517, 0.0
    %v682 = vmax.f32 %v520, 0.0
    %v683 = vmax.f32 %v525, 0.0
    %v684 = vmax.f32 %v528, 0.0
    %v685 = vmax.f32 %v533, 0.0
    %v686 = vmax.f32 %v536, 0.0
    %v687 = vmax.f32 %v541, 0.0
    %v688 = vmax.f32 %v544, 0.0
    %v689 = vmax.f32 %v549, 0.0
    %v690 = vmax.f32 %v552, 0.0
    %v691 = vmax.f32 %v557, 0.0
    %v692 = vmax.f32 %v560, 0.0
    %v693 = vmax.f32 %v565, 0.0
    %v694 = vmax.f32 %v568, 0.0
    %v695 = vmax.f32 %v573, 0.0
    %v696 = vmax.f32 %v576, 0.0
    %v697 = vmax.f32 %v581, 0.0
    %v698 = vmax.f32 %v584, 0.0
    %v699 = vmax.f32 %v589, 0.0
    %v700 = vmax.f32 %v592, 0.0
    %v701 = vmax.f32 %v597, 0.0
    %v702 = vmax.f32 %v600, 0.0
    %v703 = vmax.f32 %v605, 0.0
    %v704 = vmax.f32 %v608, 0.0
    %v705 = vmax.f32 %v613, 0.0
    %v706 = vmax.f32 %v616, 0.0
    %v707 = vmax.f32 %v621, 0.0
    %v708 = vmax.f32 %v624, 0.0
    %v709 = vmax.f32 %v629, 0.0
    %v710 = vmax.f32 %v632, 0.0
    %v711 = vmax.f32 %v637, 0.0
    %v712 = vmax.f32 %v640, 0.0
    %v713 = vmax.f32 %v645, 0.0
    %v714 = vmax.f32 %v648, 0.0
    %v715 = vpack.c.bf16 %v652, %v651
    %v716 = vpack.c.bf16 %v654, %v653
    %v717 = vpack.c.bf16 %v656, %v655
    %v718 = vpack.c.bf16 %v658, %v657
    %v719 = vpack.c.bf16 %v660, %v659
    %v720 = vpack.c.bf16 %v662, %v661
    %v721 = vpack.c.bf16 %v664, %v663
    %v722 = vpack.c.bf16 %v666, %v665
    %v723 = vpack.c.bf16 %v668, %v667
    %v724 = vpack.c.bf16 %v670, %v669
    %v725 = vpack.c.bf16 %v672, %v671
    %v726 = vpack.c.bf16 %v674, %v673
    %v727 = vpack.c.bf16 %v676, %v675
    %v728 = vpack.c.bf16 %v678, %v677
    %v729 = vpack.c.bf16 %v680, %v679
    %v730 = vpack.c.bf16 %v682, %v681
    %v731 = vpack.c.bf16 %v684, %v683
    %v732 = vpack.c.bf16 %v686, %v685
    %v733 = vpack.c.bf16 %v688, %v687
    %v734 = vpack.c.bf16 %v690, %v689
    %v735 = vpack.c.bf16 %v692, %v691
    %v736 = vpack.c.bf16 %v694, %v693
    %v737 = vpack.c.bf16 %v696, %v695
    %v738 = vpack.c.bf16 %v698, %v697
    %v739 = vpack.c.bf16 %v700, %v699
    %v740 = vpack.c.bf16 %v702, %v701
    %v741 = vpack.c.bf16 %v704, %v703
    %v742 = vpack.c.bf16 %v706, %v705
    %v743 = vpack.c.bf16 %v708, %v707
    %v744 = vpack.c.bf16 %v710, %v709
    %v745 = vpack.c.bf16 %v712, %v711
    %v746 = vpack.c.bf16 %v714, %v713
    %v747 = vld [vmem:[#allocation2] sm:$0xff]
    %v748 = vld [vmem:[#allocation2 + $0x8] sm:$0xff]
    %v749 = vld [vmem:[#allocation2 + $0x10] sm:$0xff]
    %v750 = vld [vmem:[#allocation2 + $0x18] sm:$0xff]
    %v751 = vld [vmem:[#allocation2 + $0x20] sm:$0xff]
    %v752 = vld [vmem:[#allocation2 + $0x28] sm:$0xff]
    %v753 = vld [vmem:[#allocation2 + $0x30] sm:$0xff]
    %v754 = vld [vmem:[#allocation2 + $0x38] sm:$0xff]
    %v755 = vld [vmem:[#allocation2 + $0x40] sm:$0xff]
    %v756 = vld [vmem:[#allocation2 + $0x48] sm:$0xff]
    %v757 = vld [vmem:[#allocation2 + $0x50] sm:$0xff]
    %v758 = vld [vmem:[#allocation2 + $0x58] sm:$0xff]
    %v759 = vld [vmem:[#allocation2 + $0x60] sm:$0xff]
    %v760 = vld [vmem:[#allocation2 + $0x68] sm:$0xff]
    %v761 = vld [vmem:[#allocation2 + $0x70] sm:$0xff]
    %v762 = vld [vmem:[#allocation2 + $0x78] sm:$0xff]
    %v763 = vld [vmem:[#allocation2 + $0x80] sm:$0xff]
    %v764 = vld [vmem:[#allocation2 + $0x88] sm:$0xff]
    %v765 = vld [vmem:[#allocation2 + $0x90] sm:$0xff]
    %v766 = vld [vmem:[#allocation2 + $0x98] sm:$0xff]
    %v767 = vld [vmem:[#allocation2 + $0xa0] sm:$0xff]
    %v768 = vld [vmem:[#allocation2 + $0xa8] sm:$0xff]
    %v769 = vld [vmem:[#allocation2 + $0xb0] sm:$0xff]
    %v770 = vld [vmem:[#allocation2 + $0xb8] sm:$0xff]
    %v771 = vld [vmem:[#allocation2 + $0xc0] sm:$0xff]
    %v772 = vld [vmem:[#allocation2 + $0xc8] sm:$0xff]
    %v773 = vld [vmem:[#allocation2 + $0xd0] sm:$0xff]
    %v774 = vld [vmem:[#allocation2 + $0xd8] sm:$0xff]
    %v775 = vld [vmem:[#allocation2 + $0xe0] sm:$0xff]
    %v776 = vld [vmem:[#allocation2 + $0xe8] sm:$0xff]
    %v777 = vld [vmem:[#allocation2 + $0xf0] sm:$0xff]
    %v778 = vld [vmem:[#allocation2 + $0xf8] sm:$0xff]
    %v779 = vld [vmem:[#allocation2 + $0x100] sm:$0xff]
    %v780 = vld [vmem:[#allocation2 + $0x108] sm:$0xff]
    %v781 = vld [vmem:[#allocation2 + $0x110] sm:$0xff]
    %v782 = vld [vmem:[#allocation2 + $0x118] sm:$0xff]
    %v783 = vld [vmem:[#allocation2 + $0x120] sm:$0xff]
    %v784 = vld [vmem:[#allocation2 + $0x128] sm:$0xff]
    %v785 = vld [vmem:[#allocation2 + $0x130] sm:$0xff]
    %v786 = vld [vmem:[#allocation2 + $0x138] sm:$0xff]
    %v787 = vld [vmem:[#allocation2 + $0x140] sm:$0xff]
    %v788 = vld [vmem:[#allocation2 + $0x148] sm:$0xff]
    %v789 = vld [vmem:[#allocation2 + $0x150] sm:$0xff]
    %v790 = vld [vmem:[#allocation2 + $0x158] sm:$0xff]
    %v791 = vld [vmem:[#allocation2 + $0x160] sm:$0xff]
    %v792 = vld [vmem:[#allocation2 + $0x168] sm:$0xff]
    %v793 = vld [vmem:[#allocation2 + $0x170] sm:$0xff]
    %v794 = vld [vmem:[#allocation2 + $0x178] sm:$0xff]
    %v795 = vld [vmem:[#allocation2 + $0x180] sm:$0xff]
    %v796 = vld [vmem:[#allocation2 + $0x188] sm:$0xff]
    %v797 = vld [vmem:[#allocation2 + $0x190] sm:$0xff]
    %v798 = vld [vmem:[#allocation2 + $0x198] sm:$0xff]
    %v799 = vld [vmem:[#allocation2 + $0x1a0] sm:$0xff]
    %v800 = vld [vmem:[#allocation2 + $0x1a8] sm:$0xff]
    %v801 = vld [vmem:[#allocation2 + $0x1b0] sm:$0xff]
    %v802 = vld [vmem:[#allocation2 + $0x1b8] sm:$0xff]
    %v803 = vld [vmem:[#allocation2 + $0x1c0] sm:$0xff]
    %v804 = vld [vmem:[#allocation2 + $0x1c8] sm:$0xff]
    %v805 = vld [vmem:[#allocation2 + $0x1d0] sm:$0xff]
    %v806 = vld [vmem:[#allocation2 + $0x1d8] sm:$0xff]
    %v807 = vld [vmem:[#allocation2 + $0x1e0] sm:$0xff]
    %v808 = vld [vmem:[#allocation2 + $0x1e8] sm:$0xff]
    %v809 = vld [vmem:[#allocation2 + $0x1f0] sm:$0xff]
    %v810 = vld [vmem:[#allocation2 + $0x1f8] sm:$0xff]
    %v811 = vld [vmem:[#allocation2 + $0x200] sm:$0xff]
    %v812 = vld [vmem:[#allocation2 + $0x208] sm:$0xff]
    %v813 = vld [vmem:[#allocation2 + $0x210] sm:$0xff]
    %v814 = vld [vmem:[#allocation2 + $0x218] sm:$0xff]
    %v815 = vld [vmem:[#allocation2 + $0x220] sm:$0xff]
    %v816 = vld [vmem:[#allocation2 + $0x228] sm:$0xff]
    %v817 = vld [vmem:[#allocation2 + $0x230] sm:$0xff]
    %v818 = vld [vmem:[#allocation2 + $0x238] sm:$0xff]
    %v819 = vld [vmem:[#allocation2 + $0x240] sm:$0xff]
    %v820 = vld [vmem:[#allocation2 + $0x248] sm:$0xff]
    %v821 = vld [vmem:[#allocation2 + $0x250] sm:$0xff]
    %v822 = vld [vmem:[#allocation2 + $0x258] sm:$0xff]
    %v823 = vld [vmem:[#allocation2 + $0x260] sm:$0xff]
    %v824 = vld [vmem:[#allocation2 + $0x268] sm:$0xff]
    %v825 = vld [vmem:[#allocation2 + $0x270] sm:$0xff]
    %v826 = vld [vmem:[#allocation2 + $0x278] sm:$0xff]
    %v827 = vld [vmem:[#allocation2 + $0x280] sm:$0xff]
    %v828 = vld [vmem:[#allocation2 + $0x288] sm:$0xff]
    %v829 = vld [vmem:[#allocation2 + $0x290] sm:$0xff]
    %v830 = vld [vmem:[#allocation2 + $0x298] sm:$0xff]
    %v831 = vld [vmem:[#allocation2 + $0x2a0] sm:$0xff]
    %v832 = vld [vmem:[#allocation2 + $0x2a8] sm:$0xff]
    %v833 = vld [vmem:[#allocation2 + $0x2b0] sm:$0xff]
    %v834 = vld [vmem:[#allocation2 + $0x2b8] sm:$0xff]
    %v835 = vld [vmem:[#allocation2 + $0x2c0] sm:$0xff]
    %v836 = vld [vmem:[#allocation2 + $0x2c8] sm:$0xff]
    %v837 = vld [vmem:[#allocation2 + $0x2d0] sm:$0xff]
    %v838 = vld [vmem:[#allocation2 + $0x2d8] sm:$0xff]
    %v839 = vld [vmem:[#allocation2 + $0x2e0] sm:$0xff]
    %v840 = vld [vmem:[#allocation2 + $0x2e8] sm:$0xff]
    %v841 = vld [vmem:[#allocation2 + $0x2f0] sm:$0xff]
    %v842 = vld [vmem:[#allocation2 + $0x2f8] sm:$0xff]
    %v939 = vunpack.c.l.b16 %v747
    %v940 = vunpack.c.h.b16 %v747
    %v941 = vunpack.c.l.b16 %v748
    %v942 = vunpack.c.h.b16 %v748
    %v943 = vunpack.c.l.b16 %v749
    %v944 = vunpack.c.h.b16 %v749
    %v945 = vunpack.c.l.b16 %v750
    %v946 = vunpack.c.h.b16 %v750
    %v947 = vunpack.c.l.b16 %v751
    %v948 = vunpack.c.h.b16 %v751
    %v949 = vunpack.c.l.b16 %v752
    %v950 = vunpack.c.h.b16 %v752
    %v951 = vunpack.c.l.b16 %v753
    %v952 = vunpack.c.h.b16 %v753
    %v953 = vunpack.c.l.b16 %v754
    %v954 = vunpack.c.h.b16 %v754
    %v955 = vunpack.c.l.b16 %v755
    %v956 = vunpack.c.h.b16 %v755
    %v957 = vunpack.c.l.b16 %v756
    %v958 = vunpack.c.h.b16 %v756
    %v959 = vunpack.c.l.b16 %v757
    %v960 = vunpack.c.h.b16 %v757
    %v961 = vunpack.c.l.b16 %v758
    %v962 = vunpack.c.h.b16 %v758
    %v963 = vunpack.c.l.b16 %v759
    %v964 = vunpack.c.h.b16 %v759
    %v965 = vunpack.c.l.b16 %v760
    %v966 = vunpack.c.h.b16 %v760
    %v967 = vunpack.c.l.b16 %v761
    %v968 = vunpack.c.h.b16 %v761
    %v969 = vunpack.c.l.b16 %v762
    %v970 = vunpack.c.h.b16 %v762
    %v971 = vunpack.c.l.b16 %v763
    %v972 = vunpack.c.h.b16 %v763
    %v973 = vunpack.c.l.b16 %v764
    %v974 = vunpack.c.h.b16 %v764
    %v975 = vunpack.c.l.b16 %v765
    %v976 = vunpack.c.h.b16 %v765
    %v977 = vunpack.c.l.b16 %v766
    %v978 = vunpack.c.h.b16 %v766
    %v979 = vunpack.c.l.b16 %v767
    %v980 = vunpack.c.h.b16 %v767
    %v981 = vunpack.c.l.b16 %v768
    %v982 = vunpack.c.h.b16 %v768
    %v983 = vunpack.c.l.b16 %v769
    %v984 = vunpack.c.h.b16 %v769
    %v985 = vunpack.c.l.b16 %v770
    %v986 = vunpack.c.h.b16 %v770
    %v987 = vunpack.c.l.b16 %v771
    %v988 = vunpack.c.h.b16 %v771
    %v989 = vunpack.c.l.b16 %v772
    %v990 = vunpack.c.h.b16 %v772
    %v991 = vunpack.c.l.b16 %v773
    %v992 = vunpack.c.h.b16 %v773
    %v993 = vunpack.c.l.b16 %v774
    %v994 = vunpack.c.h.b16 %v774
    %v995 = vunpack.c.l.b16 %v775
    %v996 = vunpack.c.h.b16 %v775
    %v997 = vunpack.c.l.b16 %v776
    %v998 = vunpack.c.h.b16 %v776
    %v999 = vunpack.c.l.b16 %v777
    %v1000 = vunpack.c.h.b16 %v777
    %v1001 = vunpack.c.l.b16 %v778
    %v1002 = vunpack.c.h.b16 %v778
    %v1003 = vunpack.c.l.b16 %v779
    %v1004 = vunpack.c.h.b16 %v779
    %v1005 = vunpack.c.l.b16 %v780
    %v1006 = vunpack.c.h.b16 %v780
    %v1007 = vunpack.c.l.b16 %v781
    %v1008 = vunpack.c.h.b16 %v781
    %v1009 = vunpack.c.l.b16 %v782
    %v1010 = vunpack.c.h.b16 %v782
    %v1011 = vunpack.c.l.b16 %v783
    %v1012 = vunpack.c.h.b16 %v783
    %v1013 = vunpack.c.l.b16 %v784
    %v1014 = vunpack.c.h.b16 %v784
    %v1015 = vunpack.c.l.b16 %v785
    %v1016 = vunpack.c.h.b16 %v785
    %v1017 = vunpack.c.l.b16 %v786
    %v1018 = vunpack.c.h.b16 %v786
    %v1019 = vunpack.c.l.b16 %v787
    %v1020 = vunpack.c.h.b16 %v787
    %v1021 = vunpack.c.l.b16 %v788
    %v1022 = vunpack.c.h.b16 %v788
    %v1023 = vunpack.c.l.b16 %v789
    %v1024 = vunpack.c.h.b16 %v789
    %v1025 = vunpack.c.l.b16 %v790
    %v1026 = vunpack.c.h.b16 %v790
    %v1027 = vunpack.c.l.b16 %v791
    %v1028 = vunpack.c.h.b16 %v791
    %v1029 = vunpack.c.l.b16 %v792
    %v1030 = vunpack.c.h.b16 %v792
    %v1031 = vunpack.c.l.b16 %v793
    %v1032 = vunpack.c.h.b16 %v793
    %v1033 = vunpack.c.l.b16 %v794
    %v1034 = vunpack.c.h.b16 %v794
    %v1035 = vunpack.c.l.b16 %v795
    %v1036 = vunpack.c.h.b16 %v795
    %v1037 = vunpack.c.l.b16 %v796
    %v1038 = vunpack.c.h.b16 %v796
    %v1039 = vunpack.c.l.b16 %v797
    %v1040 = vunpack.c.h.b16 %v797
    %v1041 = vunpack.c.l.b16 %v798
    %v1042 = vunpack.c.h.b16 %v798
    %v1043 = vunpack.c.l.b16 %v799
    %v1044 = vunpack.c.h.b16 %v799
    %v1045 = vunpack.c.l.b16 %v800
    %v1046 = vunpack.c.h.b16 %v800
    %v1047 = vunpack.c.l.b16 %v801
    %v1048 = vunpack.c.h.b16 %v801
    %v1049 = vunpack.c.l.b16 %v802
    %v1050 = vunpack.c.h.b16 %v802
    %v1051 = vunpack.c.l.b16 %v803
    %v1052 = vunpack.c.h.b16 %v803
    %v1053 = vunpack.c.l.b16 %v804
    %v1054 = vunpack.c.h.b16 %v804
    %v1055 = vunpack.c.l.b16 %v805
    %v1056 = vunpack.c.h.b16 %v805
    %v1057 = vunpack.c.l.b16 %v806
    %v1058 = vunpack.c.h.b16 %v806
    %v1059 = vunpack.c.l.b16 %v807
    %v1060 = vunpack.c.h.b16 %v807
    %v1061 = vunpack.c.l.b16 %v808
    %v1062 = vunpack.c.h.b16 %v808
    %v1063 = vunpack.c.l.b16 %v809
    %v1064 = vunpack.c.h.b16 %v809
    %v1065 = vunpack.c.l.b16 %v810
    %v1066 = vunpack.c.h.b16 %v810
    %v1067 = vunpack.c.l.b16 %v811
    %v1068 = vunpack.c.h.b16 %v811
    %v1069 = vunpack.c.l.b16 %v812
    %v1070 = vunpack.c.h.b16 %v812
    %v1071 = vunpack.c.l.b16 %v813
    %v1072 = vunpack.c.h.b16 %v813
    %v1073 = vunpack.c.l.b16 %v814
    %v1074 = vunpack.c.h.b16 %v814
    %v1075 = vunpack.c.l.b16 %v815
    %v1076 = vunpack.c.h.b16 %v815
    %v1077 = vunpack.c.l.b16 %v816
    %v1078 = vunpack.c.h.b16 %v816
    %v1079 = vunpack.c.l.b16 %v817
    %v1080 = vunpack.c.h.b16 %v817
    %v1081 = vunpack.c.l.b16 %v818
    %v1082 = vunpack.c.h.b16 %v818
    %v1083 = vunpack.c.l.b16 %v819
    %v1084 = vunpack.c.h.b16 %v819
    %v1085 = vunpack.c.l.b16 %v820
    %v1086 = vunpack.c.h.b16 %v820
    %v1087 = vunpack.c.l.b16 %v821
    %v1088 = vunpack.c.h.b16 %v821
    %v1089 = vunpack.c.l.b16 %v822
    %v1090 = vunpack.c.h.b16 %v822
    %v1091 = vunpack.c.l.b16 %v823
    %v1092 = vunpack.c.h.b16 %v823
    %v1093 = vunpack.c.l.b16 %v824
    %v1094 = vunpack.c.h.b16 %v824
    %v1095 = vunpack.c.l.b16 %v825
    %v1096 = vunpack.c.h.b16 %v825
    %v1097 = vunpack.c.l.b16 %v826
    %v1098 = vunpack.c.h.b16 %v826
    %v1099 = vunpack.c.l.b16 %v827
    %v1100 = vunpack.c.h.b16 %v827
    %v1101 = vunpack.c.l.b16 %v828
    %v1102 = vunpack.c.h.b16 %v828
    %v1103 = vunpack.c.l.b16 %v829
    %v1104 = vunpack.c.h.b16 %v829
    %v1105 = vunpack.c.l.b16 %v830
    %v1106 = vunpack.c.h.b16 %v830
    %v1107 = vunpack.c.l.b16 %v831
    %v1108 = vunpack.c.h.b16 %v831
    %v1109 = vunpack.c.l.b16 %v832
    %v1110 = vunpack.c.h.b16 %v832
    %v1111 = vunpack.c.l.b16 %v833
    %v1112 = vunpack.c.h.b16 %v833
    %v1113 = vunpack.c.l.b16 %v834
    %v1114 = vunpack.c.h.b16 %v834
    %v1115 = vunpack.c.l.b16 %v835
    %v1116 = vunpack.c.h.b16 %v835
    %v1117 = vunpack.c.l.b16 %v836
    %v1118 = vunpack.c.h.b16 %v836
    %v1119 = vunpack.c.l.b16 %v837
    %v1120 = vunpack.c.h.b16 %v837
    %v1121 = vunpack.c.l.b16 %v838
    %v1122 = vunpack.c.h.b16 %v838
    %v1123 = vunpack.c.l.b16 %v839
    %v1124 = vunpack.c.h.b16 %v839
    %v1125 = vunpack.c.l.b16 %v840
    %v1126 = vunpack.c.h.b16 %v840
    %v1127 = vunpack.c.l.b16 %v841
    %v1128 = vunpack.c.h.b16 %v841
    %v1129 = vunpack.c.l.b16 %v842
    %v1130 = vunpack.c.h.b16 %v842
    %v1131 = vpack.c.b16 %v943, %v939
    %v1132 = vpack.c.b16 %v944, %v940
    %v1133 = vpack.c.b16 %v945, %v941
    %v1134 = vpack.c.b16 %v946, %v942
    %v1135 = vpack.c.b16 %v951, %v947
    %v1136 = vpack.c.b16 %v952, %v948
    %v1137 = vpack.c.b16 %v953, %v949
    %v1138 = vpack.c.b16 %v954, %v950
    %v1139 = vpack.c.b16 %v959, %v955
    %v1140 = vpack.c.b16 %v960, %v956
    %v1141 = vpack.c.b16 %v961, %v957
    %v1142 = vpack.c.b16 %v962, %v958
    %v1143 = vpack.c.b16 %v967, %v963
    %v1144 = vpack.c.b16 %v968, %v964
    %v1145 = vpack.c.b16 %v969, %v965
    %v1146 = vpack.c.b16 %v970, %v966
    %v1147 = vpack.c.b16 %v975, %v971
    %v1148 = vpack.c.b16 %v976, %v972
    %v1149 = vpack.c.b16 %v977, %v973
    %v1150 = vpack.c.b16 %v978, %v974
    %v1151 = vpack.c.b16 %v983, %v979
    %v1152 = vpack.c.b16 %v984, %v980
    %v1153 = vpack.c.b16 %v985, %v981
    %v1154 = vpack.c.b16 %v986, %v982
    %v1155 = vpack.c.b16 %v991, %v987
    %v1156 = vpack.c.b16 %v992, %v988
    %v1157 = vpack.c.b16 %v993, %v989
    %v1158 = vpack.c.b16 %v994, %v990
    %v1159 = vpack.c.b16 %v999, %v995
    %v1160 = vpack.c.b16 %v1000, %v996
    %v1161 = vpack.c.b16 %v1001, %v997
    %v1162 = vpack.c.b16 %v1002, %v998
    %v1163 = vpack.c.b16 %v1007, %v1003
    %v1164 = vpack.c.b16 %v1008, %v1004
    %v1165 = vpack.c.b16 %v1009, %v1005
    %v1166 = vpack.c.b16 %v1010, %v1006
    %v1167 = vpack.c.b16 %v1015, %v1011
    %v1168 = vpack.c.b16 %v1016, %v1012
    %v1169 = vpack.c.b16 %v1017, %v1013
    %v1170 = vpack.c.b16 %v1018, %v1014
    %v1171 = vpack.c.b16 %v1023, %v1019
    %v1172 = vpack.c.b16 %v1024, %v1020
    %v1173 = vpack.c.b16 %v1025, %v1021
    %v1174 = vpack.c.b16 %v1026, %v1022
    %v1175 = vpack.c.b16 %v1031, %v1027
    %v1176 = vpack.c.b16 %v1032, %v1028
    %v1177 = vpack.c.b16 %v1033, %v1029
    %v1178 = vpack.c.b16 %v1034, %v1030
    %v1179 = vpack.c.b16 %v1039, %v1035
    %v1180 = vpack.c.b16 %v1040, %v1036
    %v1181 = vpack.c.b16 %v1041, %v1037
    %v1182 = vpack.c.b16 %v1042, %v1038
    %v1183 = vpack.c.b16 %v1047, %v1043
    %v1184 = vpack.c.b16 %v1048, %v1044
    %v1185 = vpack.c.b16 %v1049, %v1045
    %v1186 = vpack.c.b16 %v1050, %v1046
    %v1187 = vpack.c.b16 %v1055, %v1051
    %v1188 = vpack.c.b16 %v1056, %v1052
    %v1189 = vpack.c.b16 %v1057, %v1053
    %v1190 = vpack.c.b16 %v1058, %v1054
    %v1191 = vpack.c.b16 %v1063, %v1059
    %v1192 = vpack.c.b16 %v1064, %v1060
    %v1193 = vpack.c.b16 %v1065, %v1061
    %v1194 = vpack.c.b16 %v1066, %v1062
    %v1195 = vpack.c.b16 %v1071, %v1067
    %v1196 = vpack.c.b16 %v1072, %v1068
    %v1197 = vpack.c.b16 %v1073, %v1069
    %v1198 = vpack.c.b16 %v1074, %v1070
    %v1199 = vpack.c.b16 %v1079, %v1075
    %v1200 = vpack.c.b16 %v1080, %v1076
    %v1201 = vpack.c.b16 %v1081, %v1077
    %v1202 = vpack.c.b16 %v1082, %v1078
    %v1203 = vpack.c.b16 %v1087, %v1083
    %v1204 = vpack.c.b16 %v1088, %v1084
    %v1205 = vpack.c.b16 %v1089, %v1085
    %v1206 = vpack.c.b16 %v1090, %v1086
    %v1207 = vpack.c.b16 %v1095, %v1091
    %v1208 = vpack.c.b16 %v1096, %v1092
    %v1209 = vpack.c.b16 %v1097, %v1093
    %v1210 = vpack.c.b16 %v1098, %v1094
    %v1211 = vpack.c.b16 %v1103, %v1099
    %v1212 = vpack.c.b16 %v1104, %v1100
    %v1213 = vpack.c.b16 %v1105, %v1101
    %v1214 = vpack.c.b16 %v1106, %v1102
    %v1215 = vpack.c.b16 %v1111, %v1107
    %v1216 = vpack.c.b16 %v1112, %v1108
    %v1217 = vpack.c.b16 %v1113, %v1109
    %v1218 = vpack.c.b16 %v1114, %v1110
    %v1219 = vpack.c.b16 %v1119, %v1115
    %v1220 = vpack.c.b16 %v1120, %v1116
    %v1221 = vpack.c.b16 %v1121, %v1117
    %v1222 = vpack.c.b16 %v1122, %v1118
    %v1223 = vpack.c.b16 %v1127, %v1123
    %v1224 = vpack.c.b16 %v1128, %v1124
    %v1225 = vpack.c.b16 %v1129, %v1125
    %v1226 = vpack.c.b16 %v1130, %v1126
    %1323 = vmatprep.subr.bf16.mxu0 0
    %1324 = vmatpush1.bf16.msra.mxu0 %v715
    %1325 = vmatprep.subr.bf16.mxu0 0
    %1326 = vmatpush1.bf16.msra.mxu0 %v716
    %1327 = vmatprep.subr.bf16.mxu0 0
    %1328 = vmatpush1.bf16.msra.mxu0 %v717
    %1329 = vmatprep.subr.bf16.mxu0 0
    %1330 = vmatpush1.bf16.msra.mxu0 %v718
    %1331 = vmatprep.subr.bf16.mxu0 0
    %1332 = vmatpush1.bf16.msra.mxu0 %v719
    %1333 = vmatprep.subr.bf16.mxu0 0
    %1334 = vmatpush1.bf16.msra.mxu0 %v720
    %1335 = vmatprep.subr.bf16.mxu0 0
    %1336 = vmatpush1.bf16.msra.mxu0 %v721
    %1337 = vmatprep.subr.bf16.mxu0 0
    %1338 = vmatpush1.bf16.msra.mxu0 %v722
    %1339 = vmatprep.subr.bf16.mxu0 0
    %1340 = vmatpush1.bf16.msra.mxu0 %v723
    %1341 = vmatprep.subr.bf16.mxu0 0
    %1342 = vmatpush1.bf16.msra.mxu0 %v724
    %1343 = vmatprep.subr.bf16.mxu0 0
    %1344 = vmatpush1.bf16.msra.mxu0 %v725
    %1345 = vmatprep.subr.bf16.mxu0 0
    %1346 = vmatpush1.bf16.msra.mxu0 %v726
    %1347 = vmatprep.subr.bf16.mxu0 0
    %1348 = vmatpush1.bf16.msra.mxu0 %v727
    %1349 = vmatprep.subr.bf16.mxu0 0
    %1350 = vmatpush1.bf16.msra.mxu0 %v728
    %1351 = vmatprep.subr.bf16.mxu0 0
    %1352 = vmatpush1.bf16.msra.mxu0 %v729
    %1353 = vmatprep.subr.bf16.mxu0 0
    %1354 = vmatpush1.bf16.msra.mxu0 %v730
    %1355 = vmatprep.mubr.bf16.mxu0 %v1132
    %1356 = vmatmul.mubr.bf16.gmra.mrb[0].mxu0 %v1131
    %v1357 = vpop.f32.mrb[0].mxu0
    %v1358 = vadd.f32 0.0, %v1357
    %v1359 = vpop.f32.mrb[0].mxu0
    %v1360 = vpop.f32.mrb[0].mxu0
    %v1361 = vadd.f32 0.0, %v1360
    %v1362 = vpop.f32.mrb[0].mxu0
    %1363 = vmatprep.mubr.bf16.mxu0 %v1136
    %1364 = vmatmul.mubr.bf16.gmra.mrb[0].mxu0 %v1135
    %v1365 = vpop.f32.mrb[0].mxu0
    %v1366 = vadd.f32 0.0, %v1365
    %v1367 = vpop.f32.mrb[0].mxu0
    %v1368 = vpop.f32.mrb[0].mxu0
    %v1369 = vadd.f32 0.0, %v1368
    %v1370 = vpop.f32.mrb[0].mxu0
    %1371 = vmatprep.mubr.bf16.mxu0 %v1140
    %1372 = vmatmul.mubr.bf16.gmra.mrb[0].mxu0 %v1139
    %v1373 = vpop.f32.mrb[0].mxu0
    %v1374 = vadd.f32 0.0, %v1373
    %v1375 = vpop.f32.mrb[0].mxu0
    %v1376 = vpop.f32.mrb[0].mxu0
    %v1377 = vadd.f32 0.0, %v1376
    %v1378 = vpop.f32.mrb[0].mxu0
    %1379 = vmatprep.mubr.bf16.mxu0 %v1144
    %1380 = vmatmul.mubr.bf16.gmra.mrb[0].mxu0 %v1143
    %v1381 = vpop.f32.mrb[0].mxu0
    %v1382 = vadd.f32 0.0, %v1381
    %v1383 = vpop.f32.mrb[0].mxu0
    %v1384 = vpop.f32.mrb[0].mxu0
    %v1385 = vadd.f32 0.0, %v1384
    %v1386 = vpop.f32.mrb[0].mxu0
    %1387 = vmatprep.mubr.bf16.mxu0 %v1148
    %1388 = vmatmul.mubr.bf16.gmra.mrb[0].mxu0 %v1147
    %v1389 = vpop.f32.mrb[0].mxu0
    %v1390 = vadd.f32 0.0, %v1389
    %v1391 = vpop.f32.mrb[0].mxu0
    %v1392 = vpop.f32.mrb[0].mxu0
    %v1393 = vadd.f32 0.0, %v1392
    %v1394 = vpop.f32.mrb[0].mxu0
    %1395 = vmatprep.mubr.bf16.mxu0 %v1152
    %1396 = vmatmul.mubr.bf16.gmra.mrb[0].mxu0 %v1151
    %v1397 = vpop.f32.mrb[0].mxu0
    %v1398 = vadd.f32 0.0, %v1397
    %v1399 = vpop.f32.mrb[0].mxu0
    %v1400 = vpop.f32.mrb[0].mxu0
    %v1401 = vadd.f32 0.0, %v1400
    %v1402 = vpop.f32.mrb[0].mxu0
    %1403 = vmatprep.mubr.bf16.mxu0 %v1156
    %1404 = vmatmul.mubr.bf16.gmra.mrb[0].mxu0 %v1155
    %v1405 = vpop.f32.mrb[0].mxu0
    %v1406 = vadd.f32 0.0, %v1405
    %v1407 = vpop.f32.mrb[0].mxu0
    %v1408 = vpop.f32.mrb[0].mxu0
    %v1409 = vadd.f32 0.0, %v1408
    %v1410 = vpop.f32.mrb[0].mxu0
    %1411 = vmatprep.mubr.bf16.mxu0 %v1160
    %1412 = vmatmul.mubr.bf16.gmra.mrb[0].mxu0 %v1159
    %v1413 = vpop.f32.mrb[0].mxu0
    %v1414 = vadd.f32 0.0, %v1413
    %v1415 = vpop.f32.mrb[0].mxu0
    %v1416 = vpop.f32.mrb[0].mxu0
    %v1417 = vadd.f32 0.0, %v1416
    %v1418 = vpop.f32.mrb[0].mxu0
    %1419 = vmatprep.mubr.bf16.mxu0 %v1164
    %1420 = vmatmul.mubr.bf16.gmra.mrb[0].mxu0 %v1163
    %v1421 = vpop.f32.mrb[0].mxu0
    %v1422 = vadd.f32 0.0, %v1421
    %v1423 = vpop.f32.mrb[0].mxu0
    %v1424 = vpop.f32.mrb[0].mxu0
    %v1425 = vadd.f32 0.0, %v1424
    %v1426 = vpop.f32.mrb[0].mxu0
    %1427 = vmatprep.mubr.bf16.mxu0 %v1168
    %1428 = vmatmul.mubr.bf16.gmra.mrb[0].mxu0 %v1167
    %v1429 = vpop.f32.mrb[0].mxu0
    %v1430 = vadd.f32 0.0, %v1429
    %v1431 = vpop.f32.mrb[0].mxu0
    %v1432 = vpop.f32.mrb[0].mxu0
    %v1433 = vadd.f32 0.0, %v1432
    %v1434 = vpop.f32.mrb[0].mxu0
    %1435 = vmatprep.mubr.bf16.mxu0 %v1172
    %1436 = vmatmul.mubr.bf16.gmra.mrb[0].mxu0 %v1171
    %v1437 = vpop.f32.mrb[0].mxu0
    %v1438 = vadd.f32 0.0, %v1437
    %v1439 = vpop.f32.mrb[0].mxu0
    %v1440 = vpop.f32.mrb[0].mxu0
    %v1441 = vadd.f32 0.0, %v1440
    %v1442 = vpop.f32.mrb[0].mxu0
    %1443 = vmatprep.mubr.bf16.mxu0 %v1176
    %1444 = vmatmul.mubr.bf16.gmra.mrb[0].mxu0 %v1175
    %v1445 = vpop.f32.mrb[0].mxu0
    %v1446 = vadd.f32 0.0, %v1445
    %v1447 = vpop.f32.mrb[0].mxu0
    %v1448 = vpop.f32.mrb[0].mxu0
    %v1449 = vadd.f32 0.0, %v1448
    %v1450 = vpop.f32.mrb[0].mxu0
    %1451 = vmatprep.mubr.bf16.mxu0 %v1180
    %1452 = vmatmul.mubr.bf16.gmra.mrb[0].mxu0 %v1179
    %v1453 = vpop.f32.mrb[0].mxu0
    %v1454 = vadd.f32 0.0, %v1453
    %v1455 = vpop.f32.mrb[0].mxu0
    %v1456 = vpop.f32.mrb[0].mxu0
    %v1457 = vadd.f32 0.0, %v1456
    %v1458 = vpop.f32.mrb[0].mxu0
    %1459 = vmatprep.mubr.bf16.mxu0 %v1184
    %1460 = vmatmul.mubr.bf16.gmra.mrb[0].mxu0 %v1183
    %v1461 = vpop.f32.mrb[0].mxu0
    %v1462 = vadd.f32 0.0, %v1461
    %v1463 = vpop.f32.mrb[0].mxu0
    %v1464 = vpop.f32.mrb[0].mxu0
    %v1465 = vadd.f32 0.0, %v1464
    %v1466 = vpop.f32.mrb[0].mxu0
    %1467 = vmatprep.mubr.bf16.mxu0 %v1188
    %1468 = vmatmul.mubr.bf16.gmra.mrb[0].mxu0 %v1187
    %v1469 = vpop.f32.mrb[0].mxu0
    %v1470 = vadd.f32 0.0, %v1469
    %v1471 = vpop.f32.mrb[0].mxu0
    %v1472 = vpop.f32.mrb[0].mxu0
    %v1473 = vadd.f32 0.0, %v1472
    %v1474 = vpop.f32.mrb[0].mxu0
    %1475 = vmatprep.mubr.bf16.mxu0 %v1192
    %1476 = vmatmul.mubr.bf16.gmra.mrb[0].mxu0 %v1191
    %v1477 = vpop.f32.mrb[0].mxu0
    %v1478 = vadd.f32 0.0, %v1477
    %v1479 = vpop.f32.mrb[0].mxu0
    %v1480 = vpop.f32.mrb[0].mxu0
    %v1481 = vadd.f32 0.0, %v1480
    %v1482 = vpop.f32.mrb[0].mxu0
    %1483 = vmatprep.mubr.bf16.mxu0 %v1196
    %1484 = vmatmul.mubr.bf16.gmra.mrb[0].mxu0 %v1195
    %v1485 = vpop.f32.mrb[0].mxu0
    %v1486 = vadd.f32 0.0, %v1485
    %v1487 = vpop.f32.mrb[0].mxu0
    %v1488 = vpop.f32.mrb[0].mxu0
    %v1489 = vadd.f32 0.0, %v1488
    %v1490 = vpop.f32.mrb[0].mxu0
    %1491 = vmatprep.mubr.bf16.mxu0 %v1200
    %1492 = vmatmul.mubr.bf16.gmra.mrb[0].mxu0 %v1199
    %v1493 = vpop.f32.mrb[0].mxu0
    %v1494 = vadd.f32 0.0, %v1493
    %v1495 = vpop.f32.mrb[0].mxu0
    %v1496 = vpop.f32.mrb[0].mxu0
    %v1497 = vadd.f32 0.0, %v1496
    %v1498 = vpop.f32.mrb[0].mxu0
    %1499 = vmatprep.mubr.bf16.mxu0 %v1204
    %1500 = vmatmul.mubr.bf16.gmra.mrb[0].mxu0 %v1203
    %v1501 = vpop.f32.mrb[0].mxu0
    %v1502 = vadd.f32 0.0, %v1501
    %v1503 = vpop.f32.mrb[0].mxu0
    %v1504 = vpop.f32.mrb[0].mxu0
    %v1505 = vadd.f32 0.0, %v1504
    %v1506 = vpop.f32.mrb[0].mxu0
    %1507 = vmatprep.mubr.bf16.mxu0 %v1208
    %1508 = vmatmul.mubr.bf16.gmra.mrb[0].mxu0 %v1207
    %v1509 = vpop.f32.mrb[0].mxu0
    %v1510 = vadd.f32 0.0, %v1509
    %v1511 = vpop.f32.mrb[0].mxu0
    %v1512 = vpop.f32.mrb[0].mxu0
    %v1513 = vadd.f32 0.0, %v1512
    %v1514 = vpop.f32.mrb[0].mxu0
    %1515 = vmatprep.mubr.bf16.mxu0 %v1212
    %1516 = vmatmul.mubr.bf16.gmra.mrb[0].mxu0 %v1211
    %v1517 = vpop.f32.mrb[0].mxu0
    %v1518 = vadd.f32 0.0, %v1517
    %v1519 = vpop.f32.mrb[0].mxu0
    %v1520 = vpop.f32.mrb[0].mxu0
    %v1521 = vadd.f32 0.0, %v1520
    %v1522 = vpop.f32.mrb[0].mxu0
    %1523 = vmatprep.mubr.bf16.mxu0 %v1216
    %1524 = vmatmul.mubr.bf16.gmra.mrb[0].mxu0 %v1215
    %v1525 = vpop.f32.mrb[0].mxu0
    %v1526 = vadd.f32 0.0, %v1525
    %v1527 = vpop.f32.mrb[0].mxu0
    %v1528 = vpop.f32.mrb[0].mxu0
    %v1529 = vadd.f32 0.0, %v1528
    %v1530 = vpop.f32.mrb[0].mxu0
    %1531 = vmatprep.mubr.bf16.mxu0 %v1220
    %1532 = vmatmul.mubr.bf16.gmra.mrb[0].mxu0 %v1219
    %v1533 = vpop.f32.mrb[0].mxu0
    %v1534 = vadd.f32 0.0, %v1533
    %v1535 = vpop.f32.mrb[0].mxu0
    %v1536 = vpop.f32.mrb[0].mxu0
    %v1537 = vadd.f32 0.0, %v1536
    %v1538 = vpop.f32.mrb[0].mxu0
    %1539 = vmatprep.mubr.bf16.mxu0 %v1224
    %1540 = vmatmul.mubr.bf16.gmra.mrb[0].mxu0 %v1223
    %v1541 = vpop.f32.mrb[0].mxu0
    %v1542 = vadd.f32 0.0, %v1541
    %v1543 = vpop.f32.mrb[0].mxu0
    %v1544 = vpop.f32.mrb[0].mxu0
    %v1545 = vadd.f32 0.0, %v1544
    %v1546 = vpop.f32.mrb[0].mxu0
    %1547 = vdwg.mxu0
    %1548 = vmatprep.subr.bf16.mxu0 0
    %1549 = vmatpush1.bf16.msra.mxu0 %v731
    %1550 = vmatprep.subr.bf16.mxu0 0
    %1551 = vmatpush1.bf16.msra.mxu0 %v732
    %1552 = vmatprep.subr.bf16.mxu0 0
    %1553 = vmatpush1.bf16.msra.mxu0 %v733
    %1554 = vmatprep.subr.bf16.mxu0 0
    %1555 = vmatpush1.bf16.msra.mxu0 %v734
    %1556 = vmatprep.subr.bf16.mxu0 0
    %1557 = vmatpush1.bf16.msra.mxu0 %v735
    %1558 = vmatprep.subr.bf16.mxu0 0
    %1559 = vmatpush1.bf16.msra.mxu0 %v736
    %1560 = vmatprep.subr.bf16.mxu0 0
    %1561 = vmatpush1.bf16.msra.mxu0 %v737
    %1562 = vmatprep.subr.bf16.mxu0 0
    %1563 = vmatpush1.bf16.msra.mxu0 %v738
    %1564 = vmatprep.subr.bf16.mxu0 0
    %1565 = vmatpush1.bf16.msra.mxu0 %v739
    %1566 = vmatprep.subr.bf16.mxu0 0
    %1567 = vmatpush1.bf16.msra.mxu0 %v740
    %1568 = vmatprep.subr.bf16.mxu0 0
    %1569 = vmatpush1.bf16.msra.mxu0 %v741
    %1570 = vmatprep.subr.bf16.mxu0 0
    %1571 = vmatpush1.bf16.msra.mxu0 %v742
    %1572 = vmatprep.subr.bf16.mxu0 0
    %1573 = vmatpush1.bf16.msra.mxu0 %v743
    %1574 = vmatprep.subr.bf16.mxu0 0
    %1575 = vmatpush1.bf16.msra.mxu0 %v744
    %1576 = vmatprep.subr.bf16.mxu0 0
    %1577 = vmatpush1.bf16.msra.mxu0 %v745
    %1578 = vmatprep.subr.bf16.mxu0 0
    %1579 = vmatpush1.bf16.msra.mxu0 %v746
    %1580 = vmatprep.mubr.bf16.mxu0 %v1134
    %1581 = vmatmul.mubr.bf16.gmra.mrb[0].mxu0 %v1133
    %v1582 = vpop.f32.mrb[0].mxu0
    %v1583 = vadd.f32 %v1358, %v1582
    %v1584 = vpop.f32.mrb[0].mxu0
    %v1585 = vpop.f32.mrb[0].mxu0
    %v1586 = vadd.f32 %v1361, %v1585
    %v1587 = vpop.f32.mrb[0].mxu0
    %1588 = vmatprep.mubr.bf16.mxu0 %v1138
    %1589 = vmatmul.mubr.bf16.gmra.mrb[0].mxu0 %v1137
    %v1590 = vpop.f32.mrb[0].mxu0
    %v1591 = vadd.f32 %v1366, %v1590
    %v1592 = vpop.f32.mrb[0].mxu0
    %v1593 = vpop.f32.mrb[0].mxu0
    %v1594 = vadd.f32 %v1369, %v1593
    %v1595 = vpop.f32.mrb[0].mxu0
    %1596 = vmatprep.mubr.bf16.mxu0 %v1142
    %1597 = vmatmul.mubr.bf16.gmra.mrb[0].mxu0 %v1141
    %v1598 = vpop.f32.mrb[0].mxu0
    %v1599 = vadd.f32 %v1374, %v1598
    %v1600 = vpop.f32.mrb[0].mxu0
    %v1601 = vpop.f32.mrb[0].mxu0
    %v1602 = vadd.f32 %v1377, %v1601
    %v1603 = vpop.f32.mrb[0].mxu0
    %1604 = vmatprep.mubr.bf16.mxu0 %v1146
    %1605 = vmatmul.mubr.bf16.gmra.mrb[0].mxu0 %v1145
    %v1606 = vpop.f32.mrb[0].mxu0
    %v1607 = vadd.f32 %v1382, %v1606
    %v1608 = vpop.f32.mrb[0].mxu0
    %v1609 = vpop.f32.mrb[0].mxu0
    %v1610 = vadd.f32 %v1385, %v1609
    %v1611 = vpop.f32.mrb[0].mxu0
    %1612 = vmatprep.mubr.bf16.mxu0 %v1150
    %1613 = vmatmul.mubr.bf16.gmra.mrb[0].mxu0 %v1149
    %v1614 = vpop.f32.mrb[0].mxu0
    %v1615 = vadd.f32 %v1390, %v1614
    %v1616 = vpop.f32.mrb[0].mxu0
    %v1617 = vpop.f32.mrb[0].mxu0
    %v1618 = vadd.f32 %v1393, %v1617
    %v1619 = vpop.f32.mrb[0].mxu0
    %1620 = vmatprep.mubr.bf16.mxu0 %v1154
    %1621 = vmatmul.mubr.bf16.gmra.mrb[0].mxu0 %v1153
    %v1622 = vpop.f32.mrb[0].mxu0
    %v1623 = vadd.f32 %v1398, %v1622
    %v1624 = vpop.f32.mrb[0].mxu0
    %v1625 = vpop.f32.mrb[0].mxu0
    %v1626 = vadd.f32 %v1401, %v1625
    %v1627 = vpop.f32.mrb[0].mxu0
    %1628 = vmatprep.mubr.bf16.mxu0 %v1158
    %1629 = vmatmul.mubr.bf16.gmra.mrb[0].mxu0 %v1157
    %v1630 = vpop.f32.mrb[0].mxu0
    %v1631 = vadd.f32 %v1406, %v1630
    %v1632 = vpop.f32.mrb[0].mxu0
    %v1633 = vpop.f32.mrb[0].mxu0
    %v1634 = vadd.f32 %v1409, %v1633
    %v1635 = vpop.f32.mrb[0].mxu0
    %1636 = vmatprep.mubr.bf16.mxu0 %v1162
    %1637 = vmatmul.mubr.bf16.gmra.mrb[0].mxu0 %v1161
    %v1638 = vpop.f32.mrb[0].mxu0
    %v1639 = vadd.f32 %v1414, %v1638
    %v1640 = vpop.f32.mrb[0].mxu0
    %v1641 = vpop.f32.mrb[0].mxu0
    %v1642 = vadd.f32 %v1417, %v1641
    %v1643 = vpop.f32.mrb[0].mxu0
    %1644 = vmatprep.mubr.bf16.mxu0 %v1166
    %1645 = vmatmul.mubr.bf16.gmra.mrb[0].mxu0 %v1165
    %v1646 = vpop.f32.mrb[0].mxu0
    %v1647 = vadd.f32 %v1422, %v1646
    %v1648 = vpop.f32.mrb[0].mxu0
    %v1649 = vpop.f32.mrb[0].mxu0
    %v1650 = vadd.f32 %v1425, %v1649
    %v1651 = vpop.f32.mrb[0].mxu0
    %1652 = vmatprep.mubr.bf16.mxu0 %v1170
    %1653 = vmatmul.mubr.bf16.gmra.mrb[0].mxu0 %v1169
    %v1654 = vpop.f32.mrb[0].mxu0
    %v1655 = vadd.f32 %v1430, %v1654
    %v1656 = vpop.f32.mrb[0].mxu0
    %v1657 = vpop.f32.mrb[0].mxu0
    %v1658 = vadd.f32 %v1433, %v1657
    %v1659 = vpop.f32.mrb[0].mxu0
    %1660 = vmatprep.mubr.bf16.mxu0 %v1174
    %1661 = vmatmul.mubr.bf16.gmra.mrb[0].mxu0 %v1173
    %v1662 = vpop.f32.mrb[0].mxu0
    %v1663 = vadd.f32 %v1438, %v1662
    %v1664 = vpop.f32.mrb[0].mxu0
    %v1665 = vpop.f32.mrb[0].mxu0
    %v1666 = vadd.f32 %v1441, %v1665
    %v1667 = vpop.f32.mrb[0].mxu0
    %1668 = vmatprep.mubr.bf16.mxu0 %v1178
    %1669 = vmatmul.mubr.bf16.gmra.mrb[0].mxu0 %v1177
    %v1670 = vpop.f32.mrb[0].mxu0
    %v1671 = vadd.f32 %v1446, %v1670
    %v1672 = vpop.f32.mrb[0].mxu0
    %v1673 = vpop.f32.mrb[0].mxu0
    %v1674 = vadd.f32 %v1449, %v1673
    %v1675 = vpop.f32.mrb[0].mxu0
    %1676 = vmatprep.mubr.bf16.mxu0 %v1182
    %1677 = vmatmul.mubr.bf16.gmra.mrb[0].mxu0 %v1181
    %v1678 = vpop.f32.mrb[0].mxu0
    %v1679 = vadd.f32 %v1454, %v1678
    %v1680 = vpop.f32.mrb[0].mxu0
    %v1681 = vpop.f32.mrb[0].mxu0
    %v1682 = vadd.f32 %v1457, %v1681
    %v1683 = vpop.f32.mrb[0].mxu0
    %1684 = vmatprep.mubr.bf16.mxu0 %v1186
    %1685 = vmatmul.mubr.bf16.gmra.mrb[0].mxu0 %v1185
    %v1686 = vpop.f32.mrb[0].mxu0
    %v1687 = vadd.f32 %v1462, %v1686
    %v1688 = vpop.f32.mrb[0].mxu0
    %v1689 = vpop.f32.mrb[0].mxu0
    %v1690 = vadd.f32 %v1465, %v1689
    %v1691 = vpop.f32.mrb[0].mxu0
    %1692 = vmatprep.mubr.bf16.mxu0 %v1190
    %1693 = vmatmul.mubr.bf16.gmra.mrb[0].mxu0 %v1189
    %v1694 = vpop.f32.mrb[0].mxu0
    %v1695 = vadd.f32 %v1470, %v1694
    %v1696 = vpop.f32.mrb[0].mxu0
    %v1697 = vpop.f32.mrb[0].mxu0
    %v1698 = vadd.f32 %v1473, %v1697
    %v1699 = vpop.f32.mrb[0].mxu0
    %1700 = vmatprep.mubr.bf16.mxu0 %v1194
    %1701 = vmatmul.mubr.bf16.gmra.mrb[0].mxu0 %v1193
    %v1702 = vpop.f32.mrb[0].mxu0
    %v1703 = vadd.f32 %v1478, %v1702
    %v1704 = vpop.f32.mrb[0].mxu0
    %v1705 = vpop.f32.mrb[0].mxu0
    %v1706 = vadd.f32 %v1481, %v1705
    %v1707 = vpop.f32.mrb[0].mxu0
    %1708 = vmatprep.mubr.bf16.mxu0 %v1198
    %1709 = vmatmul.mubr.bf16.gmra.mrb[0].mxu0 %v1197
    %v1710 = vpop.f32.mrb[0].mxu0
    %v1711 = vadd.f32 %v1486, %v1710
    %v1712 = vpop.f32.mrb[0].mxu0
    %v1713 = vpop.f32.mrb[0].mxu0
    %v1714 = vadd.f32 %v1489, %v1713
    %v1715 = vpop.f32.mrb[0].mxu0
    %1716 = vmatprep.mubr.bf16.mxu0 %v1202
    %1717 = vmatmul.mubr.bf16.gmra.mrb[0].mxu0 %v1201
    %v1718 = vpop.f32.mrb[0].mxu0
    %v1719 = vadd.f32 %v1494, %v1718
    %v1720 = vpop.f32.mrb[0].mxu0
    %v1721 = vpop.f32.mrb[0].mxu0
    %v1722 = vadd.f32 %v1497, %v1721
    %v1723 = vpop.f32.mrb[0].mxu0
    %1724 = vmatprep.mubr.bf16.mxu0 %v1206
    %1725 = vmatmul.mubr.bf16.gmra.mrb[0].mxu0 %v1205
    %v1726 = vpop.f32.mrb[0].mxu0
    %v1727 = vadd.f32 %v1502, %v1726
    %v1728 = vpop.f32.mrb[0].mxu0
    %v1729 = vpop.f32.mrb[0].mxu0
    %v1730 = vadd.f32 %v1505, %v1729
    %v1731 = vpop.f32.mrb[0].mxu0
    %1732 = vmatprep.mubr.bf16.mxu0 %v1210
    %1733 = vmatmul.mubr.bf16.gmra.mrb[0].mxu0 %v1209
    %v1734 = vpop.f32.mrb[0].mxu0
    %v1735 = vadd.f32 %v1510, %v1734
    %v1736 = vpop.f32.mrb[0].mxu0
    %v1737 = vpop.f32.mrb[0].mxu0
    %v1738 = vadd.f32 %v1513, %v1737
    %v1739 = vpop.f32.mrb[0].mxu0
    %1740 = vmatprep.mubr.bf16.mxu0 %v1214
    %1741 = vmatmul.mubr.bf16.gmra.mrb[0].mxu0 %v1213
    %v1742 = vpop.f32.mrb[0].mxu0
    %v1743 = vadd.f32 %v1518, %v1742
    %v1744 = vpop.f32.mrb[0].mxu0
    %v1745 = vpop.f32.mrb[0].mxu0
    %v1746 = vadd.f32 %v1521, %v1745
    %v1747 = vpop.f32.mrb[0].mxu0
    %1748 = vmatprep.mubr.bf16.mxu0 %v1218
    %1749 = vmatmul.mubr.bf16.gmra.mrb[0].mxu0 %v1217
    %v1750 = vpop.f32.mrb[0].mxu0
    %v1751 = vadd.f32 %v1526, %v1750
    %v1752 = vpop.f32.mrb[0].mxu0
    %v1753 = vpop.f32.mrb[0].mxu0
    %v1754 = vadd.f32 %v1529, %v1753
    %v1755 = vpop.f32.mrb[0].mxu0
    %1756 = vmatprep.mubr.bf16.mxu0 %v1222
    %1757 = vmatmul.mubr.bf16.gmra.mrb[0].mxu0 %v1221
    %v1758 = vpop.f32.mrb[0].mxu0
    %v1759 = vadd.f32 %v1534, %v1758
    %v1760 = vpop.f32.mrb[0].mxu0
    %v1761 = vpop.f32.mrb[0].mxu0
    %v1762 = vadd.f32 %v1537, %v1761
    %v1763 = vpop.f32.mrb[0].mxu0
    %1764 = vmatprep.mubr.bf16.mxu0 %v1226
    %1765 = vmatmul.mubr.bf16.gmra.mrb[0].mxu0 %v1225
    %v1766 = vpop.f32.mrb[0].mxu0
    %v1767 = vadd.f32 %v1542, %v1766
    %v1768 = vpop.f32.mrb[0].mxu0
    %v1769 = vpop.f32.mrb[0].mxu0
    %v1770 = vadd.f32 %v1545, %v1769
    %v1771 = vpop.f32.mrb[0].mxu0
    %1772 = vdwg.mxu0
    %v1773 = vmax.f32 %v1583, 0.0
    %v1774 = vmax.f32 %v1586, 0.0
    %v1775 = vmax.f32 %v1591, 0.0
    %v1776 = vmax.f32 %v1594, 0.0
    %v1777 = vmax.f32 %v1599, 0.0
    %v1778 = vmax.f32 %v1602, 0.0
    %v1779 = vmax.f32 %v1607, 0.0
    %v1780 = vmax.f32 %v1610, 0.0
    %v1781 = vmax.f32 %v1615, 0.0
    %v1782 = vmax.f32 %v1618, 0.0
    %v1783 = vmax.f32 %v1623, 0.0
    %v1784 = vmax.f32 %v1626, 0.0
    %v1785 = vmax.f32 %v1631, 0.0
    %v1786 = vmax.f32 %v1634, 0.0
    %v1787 = vmax.f32 %v1639, 0.0
    %v1788 = vmax.f32 %v1642, 0.0
    %v1789 = vmax.f32 %v1647, 0.0
    %v1790 = vmax.f32 %v1650, 0.0
    %v1791 = vmax.f32 %v1655, 0.0
    %v1792 = vmax.f32 %v1658, 0.0
    %v1793 = vmax.f32 %v1663, 0.0
    %v1794 = vmax.f32 %v1666, 0.0
    %v1795 = vmax.f32 %v1671, 0.0
    %v1796 = vmax.f32 %v1674, 0.0
    %v1797 = vmax.f32 %v1679, 0.0
    %v1798 = vmax.f32 %v1682, 0.0
    %v1799 = vmax.f32 %v1687, 0.0
    %v1800 = vmax.f32 %v1690, 0.0
    %v1801 = vmax.f32 %v1695, 0.0
    %v1802 = vmax.f32 %v1698, 0.0
    %v1803 = vmax.f32 %v1703, 0.0
    %v1804 = vmax.f32 %v1706, 0.0
    %v1805 = vmax.f32 %v1711, 0.0
    %v1806 = vmax.f32 %v1714, 0.0
    %v1807 = vmax.f32 %v1719, 0.0
    %v1808 = vmax.f32 %v1722, 0.0
    %v1809 = vmax.f32 %v1727, 0.0
    %v1810 = vmax.f32 %v1730, 0.0
    %v1811 = vmax.f32 %v1735, 0.0
    %v1812 = vmax.f32 %v1738, 0.0
    %v1813 = vmax.f32 %v1743, 0.0
    %v1814 = vmax.f32 %v1746, 0.0
    %v1815 = vmax.f32 %v1751, 0.0
    %v1816 = vmax.f32 %v1754, 0.0
    %v1817 = vmax.f32 %v1759, 0.0
    %v1818 = vmax.f32 %v1762, 0.0
    %v1819 = vmax.f32 %v1767, 0.0
    %v1820 = vmax.f32 %v1770, 0.0
    %v1821 = vpack.c.bf16 %v1774, %v1773
    %v1822 = vpack.c.bf16 %v1776, %v1775
    %v1823 = vpack.c.bf16 %v1778, %v1777
    %v1824 = vpack.c.bf16 %v1780, %v1779
    %v1825 = vpack.c.bf16 %v1782, %v1781
    %v1826 = vpack.c.bf16 %v1784, %v1783
    %v1827 = vpack.c.bf16 %v1786, %v1785
    %v1828 = vpack.c.bf16 %v1788, %v1787
    %v1829 = vpack.c.bf16 %v1790, %v1789
    %v1830 = vpack.c.bf16 %v1792, %v1791
    %v1831 = vpack.c.bf16 %v1794, %v1793
    %v1832 = vpack.c.bf16 %v1796, %v1795
    %v1833 = vpack.c.bf16 %v1798, %v1797
    %v1834 = vpack.c.bf16 %v1800, %v1799
    %v1835 = vpack.c.bf16 %v1802, %v1801
    %v1836 = vpack.c.bf16 %v1804, %v1803
    %v1837 = vpack.c.bf16 %v1806, %v1805
    %v1838 = vpack.c.bf16 %v1808, %v1807
    %v1839 = vpack.c.bf16 %v1810, %v1809
    %v1840 = vpack.c.bf16 %v1812, %v1811
    %v1841 = vpack.c.bf16 %v1814, %v1813
    %v1842 = vpack.c.bf16 %v1816, %v1815
    %v1843 = vpack.c.bf16 %v1818, %v1817
    %v1844 = vpack.c.bf16 %v1820, %v1819
    %v1845 = vld [vmem:[%s3] sm:$0xff]
    %v1846 = vld [vmem:[%s3 + $0x8] sm:$0xf]
    %v1849 = vunpack.c.l.b16 %v1845
    %v1850 = vunpack.c.h.b16 %v1845
    %v1851 = vunpack.c.l.b16 %v1846
    %v1852 = vpack.c.b16 %v1849, %v1849
    %v1853 = vpack.c.b16 %v1850, %v1850
    %v1854 = vpack.c.b16 %v1851, %v1851
    %1858 = vmatprep.subr.bf16.mxu0 0
    %1859 = vmatpush1.bf16.msra.mxu0 %v1821
    %1860 = vmatprep.subr.bf16.mxu0 0
    %1861 = vmatpush1.bf16.msra.mxu0 %v1822
    %1862 = vmatprep.subr.bf16.mxu0 0
    %1863 = vmatpush1.bf16.msra.mxu0 %v1823
    %1864 = vmatprep.subr.bf16.mxu0 0
    %1865 = vmatpush1.bf16.msra.mxu0 %v1824
    %1866 = vmatprep.subr.bf16.mxu0 0
    %1867 = vmatpush1.bf16.msra.mxu0 %v1825
    %1868 = vmatprep.subr.bf16.mxu0 0
    %1869 = vmatpush1.bf16.msra.mxu0 %v1826
    %1870 = vmatprep.subr.bf16.mxu0 0
    %1871 = vmatpush1.bf16.msra.mxu0 %v1827
    %1872 = vmatprep.subr.bf16.mxu0 0
    %1873 = vmatpush1.bf16.msra.mxu0 %v1828
    %1874 = vmatprep.subr.bf16.mxu0 0
    %1875 = vmatpush1.bf16.msra.mxu0 %v1829
    %1876 = vmatprep.subr.bf16.mxu0 0
    %1877 = vmatpush1.bf16.msra.mxu0 %v1830
    %1878 = vmatprep.subr.bf16.mxu0 0
    %1879 = vmatpush1.bf16.msra.mxu0 %v1831
    %1880 = vmatprep.subr.bf16.mxu0 0
    %1881 = vmatpush1.bf16.msra.mxu0 %v1832
    %1882 = vmatprep.subr.bf16.mxu0 0
    %1883 = vmatpush1.bf16.msra.mxu0 %v1833
    %1884 = vmatprep.subr.bf16.mxu0 0
    %1885 = vmatpush1.bf16.msra.mxu0 %v1834
    %1886 = vmatprep.subr.bf16.mxu0 0
    %1887 = vmatpush1.bf16.msra.mxu0 %v1835
    %1888 = vmatprep.subr.bf16.mxu0 0
    %1889 = vmatpush1.bf16.msra.mxu0 %v1836
    %1890 = vmatprep.mubr.bf16.mxu0 %v1853
    %1891 = vmatmul.mubr.bf16.gmra.mrb[0].mxu0 %v1852
    %v1892 = vpop.f32.mrb[0].mxu0
    %v1893 = vadd.f32 0.0, %v1892
    %v1894 = vpop.f32.mrb[0].mxu0
    %v1895 = vpop.f32.mrb[0].mxu0
    %v1896 = vpop.f32.mrb[0].mxu0
    %1897 = vdwg.mxu0
    %1898 = vmatprep.subr.bf16.mxu0 0
    %1899 = vmatpush1.bf16.msra.mxu0 %v1837
    %1900 = vmatprep.subr.bf16.mxu0 0
    %1901 = vmatpush1.bf16.msra.mxu0 %v1838
    %1902 = vmatprep.subr.bf16.mxu0 0
    %1903 = vmatpush1.bf16.msra.mxu0 %v1839
    %1904 = vmatprep.subr.bf16.mxu0 0
    %1905 = vmatpush1.bf16.msra.mxu0 %v1840
    %1906 = vmatprep.subr.bf16.mxu0 0
    %1907 = vmatpush1.bf16.msra.mxu0 %v1841
    %1908 = vmatprep.subr.bf16.mxu0 0
    %1909 = vmatpush1.bf16.msra.mxu0 %v1842
    %1910 = vmatprep.subr.bf16.mxu0 0
    %1911 = vmatpush1.bf16.msra.mxu0 %v1843
    %1912 = vmatprep.subr.bf16.mxu0 0
    %1913 = vmatpush1.bf16.msra.mxu0 %v1844
    %1914 = vmatprep.subr.bf16.mxu0 0
    %1915 = vmatpush1.bf16.msra.mxu0 0
    %1916 = vmatprep.subr.bf16.mxu0 0
    %1917 = vmatpush1.bf16.msra.mxu0 0
    %1918 = vmatprep.subr.bf16.mxu0 0
    %1919 = vmatpush1.bf16.msra.mxu0 0
    %1920 = vmatprep.subr.bf16.mxu0 0
    %1921 = vmatpush1.bf16.msra.mxu0 0
    %1922 = vmatprep.subr.bf16.mxu0 0
    %1923 = vmatpush1.bf16.msra.mxu0 0
    %1924 = vmatprep.subr.bf16.mxu0 0
    %1925 = vmatpush1.bf16.msra.mxu0 0
    %1926 = vmatprep.subr.bf16.mxu0 0
    %1927 = vmatpush1.bf16.msra.mxu0 0
    %1928 = vmatprep.subr.bf16.mxu0 0
    %1929 = vmatpush1.bf16.msra.mxu0 0
    %1930 = vmatprep.mubr.bf16.mxu0 0
    %1931 = vmatmul.mubr.bf16.gmra.mrb[0].mxu0 %v1854
    %v1932 = vpop.f32.mrb[0].mxu0
    %v1933 = vadd.f32 %v1893, %v1932
    %v1934 = vpop.f32.mrb[0].mxu0
    %v1935 = vpop.f32.mrb[0].mxu0
    %v1936 = vpop.f32.mrb[0].mxu0
    %1937 = vdwg.mxu0
    %1938 = vst [vmem:[#allocation5] sm:$0xff] %v1933
    // Predicated region
    $region22: #{tpu_custom_call.1} parent=1 // pred_check
      _
    $region23: #{tpu_custom_call.1} parent=1 // pred_check_branch
      %1940 = sbr.rel (0) target = $region25
    $region24: #{tpu_custom_call.1} parent=1 // pred_region
      %s1942 = ssub.s32 128, 128
      %1943 = vsyncadd [#allocation4], %s1942
      %s1945 = sshll.u32 [#allocation5], 4
      %s1946 = int_to_ptr.vmem [resolvable:$true] %s1945
      %1948 = dma.vmem_to_hbm [thread:$0]  %s1946, 128, %s4, [#allocation4]
    $region25: #{tpu_custom_call.1} parent=1 // pred_fallthru
      _
    // Predicated region
    $region26: #{tpu_custom_call.1} parent=1 // pred_check
      _
    $region27: #{tpu_custom_call.1} parent=1 // pred_check_branch
      %1950 = sbr.rel (0) target = $region29
    $region28: #{tpu_custom_call.1} parent=1 // pred_region
      %1951 = dma.done [#allocation4], 128
    $region29: #{tpu_custom_call.1} parent=1 // pred_fallthru
      _
    %1952 = vsyncpa [#allocation3], 1
    %1953 = vsyncpa [#allocation4], 1

</llo_original>
